<compile_context>
chip_gen: v7x
topology: tpu7x:2x2x1
jax: 0.10.0
libtpu: 0.0.40
codegen_flags: <defaults>
</compile_context>

<pallas_src>
import functools
import math

import jax
import jax.numpy as jnp
from jax import lax
from jax.experimental import pallas as pl
from jax.experimental.pallas import tpu as pltpu


# ----------------------------------------------------------------------------
# Fused kernel: one batch item per grid step
# ----------------------------------------------------------------------------
def _pf4_rcab_kernel(x_ref,
                     w_enc_ref, b_enc_ref,
                     w_fus_ref, b_fus_ref,
                     w_dec_e_ref, w_dec_f_ref, b_dec_ref,
                     w_r1_ref, b_r1_ref,
                     w_r2_ref, b_r2_ref,
                     w_ca1_ref, b_ca1_ref,
                     w_ca2_ref, b_ca2_ref,
                     out_ref,
                     pad_ref, patch_ref, enc_ref,
                     *, H, W, nf, nframes, slope):
    F = nframes
    WC = W * nf                       # merged lane width (128 at the test size)
    f32 = jnp.float32

    # ---- zero only the 1-pixel halo; interiors are fully overwritten below ----
    pad_ref[0:1, :] = jnp.zeros((1, (W + 2) * nf), f32)
    pad_ref[H + 1:H + 2, :] = jnp.zeros((1, (W + 2) * nf), f32)
    pad_ref[:, 0:nf] = jnp.zeros((H + 2, nf), f32)
    pad_ref[:, (W + 1) * nf:(W + 2) * nf] = jnp.zeros((H + 2, nf), f32)

    def lrelu(v):
        return jnp.where(v >= 0.0, v, slope * v)

    def fill_patch(row0, src):
        """Write `src` (H, W*nf) into the pad interior and emit its 9 im2col taps
        into patch rows [row0, row0+H).  Every patch store is a full lane-aligned
        (H, 128) store; the tap reads carry the inherent 3x3-halo lane shift."""
        pad_ref[1:H + 1, nf:nf + WC] = src
        for dy in range(3):
            for dx in range(3):
                t = dy * 3 + dx
                patch_ref[row0:row0 + H, t * WC:(t + 1) * WC] = (
                    pad_ref[dy:dy + H, dx * nf:dx * nf + WC])

    # ---------------- encoder: shared conv3x3 + LeakyReLU, 4 frames batched ---
    for f in range(F):
        fill_patch(f * H, x_ref[0, f].astype(f32))
    enc = jnp.dot(patch_ref[...], w_enc_ref[...], preferred_element_type=f32)
    enc_ref[...] = lrelu(enc + b_enc_ref[...])                     # (F*H, WC)

    # ---------------- fusion: 1x1 conv over the 4-frame channel concat --------
    fus = jnp.dot(enc_ref[0:H, :], w_fus_ref[0], preferred_element_type=f32)
    for f in range(1, F):
        fus = fus + jnp.dot(enc_ref[f * H:(f + 1) * H, :], w_fus_ref[f],
                            preferred_element_type=f32)
    fus = fus + b_fus_ref[...]                                     # (H, WC)

    # ---------------- decoder: frame-invariant fusion half (computed ONCE) ----
    fill_patch(0, fus)
    fus_contrib = jnp.dot(patch_ref[0:H, :], w_dec_f_ref[...],
                          preferred_element_type=f32) + b_dec_ref[...]

    # ---------------- decoder: encoder half, batched over frames --------------
    for f in range(F):
        fill_patch(f * H, enc_ref[f * H:(f + 1) * H, :])
    d = jnp.dot(patch_ref[...], w_dec_e_ref[...], preferred_element_type=f32)
    d = lrelu(d.reshape(F, H, WC) + fus_contrib[None, :, :])       # (F, H, WC)

    # ---------------- RCAB body: conv3x3 -> ReLU -> conv3x3 -------------------
    for f in range(F):
        fill_patch(f * H, d[f])
    r = jnp.dot(patch_ref[...], w_r1_ref[...], preferred_element_type=f32)
    r = jnp.maximum(r + b_r1_ref[...], 0.0).reshape(F, H, WC)

    for f in range(F):
        fill_patch(f * H, r[f])
    r = jnp.dot(patch_ref[...], w_r2_ref[...], preferred_element_type=f32)
    r = (r + b_r2_ref[...]).reshape(F, H, WC)

    # ---------------- channel attention (squeeze-excite), all frames at once --
    # VPU/XLU broadcast-multiply + reductions; the mean over w is folded into
    # w_ca1 in the wrapper and zero padding keeps the math exact.
    pooled = jnp.mean(r, axis=1)                                   # (F, WC)
    h = jnp.sum(pooled[:, None, :] * w_ca1_ref[...][None, :, :], axis=-1)
    h = jnp.maximum(h + b_ca1_ref[...], 0.0)                       # (F, NR)
    s = jnp.sum(h[:, :, None] * w_ca2_ref[...][None, :, :], axis=1)
    scale = 1.0 / (1.0 + jnp.exp(-(s + b_ca2_ref[...])))           # (F, WC)

    # ---- CA gate + RCAB residual + outer block residual; one lane-dense store.
    out = r * scale[:, None, :] + d + x_ref[0].astype(f32)
    out_ref[...] = out.reshape(1, F, H, WC).astype(out_ref.dtype)


# ----------------------------------------------------------------------------
# Wrapper
# ----------------------------------------------------------------------------
def progressive_fusion_block_4f_rcab(x, params, *, slope=0.1):
    """x: (B, 4, H, W, nf) float32 -> (B, 4, H, W, nf)."""
    B, F, H, W, nf = x.shape
    assert F == 4
    WC = W * nf
    f32 = jnp.float32

    # ---- block-diagonal ("merged-lane") weight expansion ---------------------
    eyeW = jnp.eye(W, dtype=f32)

    def expand3x3(w3):                    # (3,3,cin,cout) -> (9*W*cin, W*cout)
        cin, cout = w3.shape[2], w3.shape[3]
        w9 = w3.reshape(9, cin, cout)
        return jnp.einsum("tio,wv->twivo", w9, eyeW).reshape(9 * W * cin, W * cout)

    def expand1x1(w1):                    # (cin, cout) -> (W*cin, W*cout)
        cin, cout = w1.shape
        return jnp.einsum("io,wv->wivo", w1, eyeW).reshape(W * cin, W * cout)

    def tile_row(b):                      # (c,) -> (1, W*c), lane index w*c+ci
        return jnp.tile(b, (W,)).reshape(1, W * b.shape[0])

    w_enc_big = expand3x3(params["w_enc"])
    # decoder input concat order is [encoder | fusion]; split so the fusion half
    # can be hoisted out of the per-frame loop.
    w_dec_e_big = expand3x3(params["w_dec"][:, :, :nf, :])
    w_dec_f_big = expand3x3(params["w_dec"][:, :, nf:, :])
    w_r1_big = expand3x3(params["w_r1"])
    w_r2_big = expand3x3(params["w_r2"])
    w_fus_big = jnp.stack([expand1x1(params["w_fus"][f * nf:(f + 1) * nf, :])
                           for f in range(F)], axis=0)              # (4, WC, WC)

    nred = params["w_ca1"].shape[1]
    NR = max(8, ((nred + 7) // 8) * 8)
    # CA weights for broadcast-multiply reductions (exact: padded rows give 0;
    # the /W folds the spatial mean over w into the weight).
    w_ca1t = jnp.pad(jnp.tile(params["w_ca1"].T, (1, W)) / W,
                     ((0, NR - nred), (0, 0)))                       # (NR, WC)
    b_ca1p = jnp.pad(params["b_ca1"], (0, NR - nred)).reshape(1, NR)
    w_ca2t = jnp.pad(jnp.tile(params["w_ca2"], (1, W)),
                     ((0, NR - nred), (0, 0)))                       # (NR, WC)

    def cspec(shape):                     # grid-invariant, full-block operand
        n = len(shape)
        return pl.BlockSpec(shape, lambda b: (0,) * n)

    # Lane-dense HBM I/O: (B, F, H, W*nf) so the input block and the final
    # output store are full 128-lane tiles (W*nf = 128 at the test size).
    x_m = x.reshape(B, F, H, WC)

    kernel = functools.partial(_pf4_rcab_kernel, H=H, W=W, nf=nf,
                               nframes=F, slope=slope)

    out = pl.pallas_call(
        kernel,
        out_shape=jax.ShapeDtypeStruct((B, F, H, WC), x.dtype),
        grid=(B,),
        in_specs=[
            pl.BlockSpec((1, F, H, WC), lambda b: (b, 0, 0, 0)),
            cspec((9 * WC, WC)), cspec((1, WC)),
            cspec((F, WC, WC)), cspec((1, WC)),
            cspec((9 * WC, WC)), cspec((9 * WC, WC)), cspec((1, WC)),
            cspec((9 * WC, WC)), cspec((1, WC)),
            cspec((9 * WC, WC)), cspec((1, WC)),
            cspec((NR, WC)), cspec((1, NR)),
            cspec((NR, WC)), cspec((1, WC)),
        ],
        out_specs=pl.BlockSpec((1, F, H, WC), lambda b: (b, 0, 0, 0)),
        scratch_shapes=[
            pltpu.VMEM((H + 2, (W + 2) * nf), jnp.float32),   # zero-halo pad
            pltpu.VMEM((F * H, 9 * WC), jnp.float32),         # shared im2col patch
            pltpu.VMEM((F * H, WC), jnp.float32),             # encoder outputs
        ],
        compiler_params=pltpu.CompilerParams(
            dimension_semantics=("parallel",),
            vmem_limit_bytes=48 * 1024 * 1024),
    )(x_m,
      w_enc_big, tile_row(params["b_enc"]),
      w_fus_big, tile_row(params["b_fus"]),
      w_dec_e_big, w_dec_f_big, tile_row(params["b_dec"]),
      w_r1_big, tile_row(params["b_r1"]),
      w_r2_big, tile_row(params["b_r2"]),
      w_ca1t, b_ca1p,
      w_ca2t, tile_row(params["b_ca2"]))

    return out.reshape(B, F, H, W, nf)


# ----------------------------------------------------------------------------
# Deterministic parameter init (shapes from the PyTorch module's __init__)
# ----------------------------------------------------------------------------
def init_params(key, nf, reduction=8):
    ks = jax.random.split(key, 16)
    nred = max(nf // reduction, 1)

    def conv_w(k, kh, kw, cin, cout, scale):
        std = scale * math.sqrt(2.0 / (cin * kh * kw))
        return std * jax.random.normal(k, (kh, kw, cin, cout), jnp.float32)

    def bias(k, c):
        return 0.05 * jax.random.normal(k, (c,), jnp.float32)

    return dict(
        w_enc=conv_w(ks[0], 3, 3, nf, nf, 1.0), b_enc=bias(ks[1], nf),
        w_fus=conv_w(ks[2], 1, 1, 4 * nf, nf, 0.1).reshape(4 * nf, nf),
        b_fus=bias(ks[3], nf),
        w_dec=conv_w(ks[4], 3, 3, 2 * nf, nf, 0.1), b_dec=bias(ks[5], nf),
        w_r1=conv_w(ks[6], 3, 3, nf, nf, 0.1), b_r1=bias(ks[7], nf),
        w_r2=conv_w(ks[8], 3, 3, nf, nf, 0.1), b_r2=bias(ks[9], nf),
        w_ca1=conv_w(ks[10], 1, 1, nf, nred, 0.1).reshape(nf, nred),
        b_ca1=bias(ks[11], nred),
        w_ca2=conv_w(ks[12], 1, 1, nred, nf, 0.1).reshape(nred, nf),
        b_ca2=bias(ks[13], nf),
    )


# ----------------------------------------------------------------------------
# Pure-JAX reference (mirrors the PyTorch forward in NHWC)
# ----------------------------------------------------------------------------
def ref_forward(x, p):
    B, F, H, W, nf = x.shape
    hi = lax.Precision.HIGHEST

    def conv3(xa, w, b):
        y = lax.conv_general_dilated(xa, w, (1, 1), "SAME",
                                     dimension_numbers=("NHWC", "HWIO", "NHWC"),
                                     precision=hi)
        return y + b

    def lrelu(v):
        return jnp.where(v >= 0, v, 0.1 * v)

    xf = x.reshape(B * F, H, W, nf)
    enc = lrelu(conv3(xf, p["w_enc"], p["b_enc"])).reshape(B, F, H, W, nf)

    fus_in = jnp.transpose(enc, (0, 2, 3, 1, 4)).reshape(B, H, W, F * nf)
    fus = jnp.einsum("bhwk,kc->bhwc", fus_in, p["w_fus"], precision=hi) + p["b_fus"]

    def decode(e, xin):
        d = lrelu(conv3(jnp.concatenate([e, fus], -1), p["w_dec"], p["b_dec"]))
        r = jax.nn.relu(conv3(d, p["w_r1"], p["b_r1"]))
        r = conv3(r, p["w_r2"], p["b_r2"])
        pooled = jnp.mean(r, axis=(1, 2), keepdims=True)               # (B,1,1,nf)
        h = jax.nn.relu(jnp.einsum("bijc,cd->bijd", pooled, p["w_ca1"],
                                   precision=hi) + p["b_ca1"])
        s = jax.nn.sigmoid(jnp.einsum("bijd,dc->bijc", h, p["w_ca2"],
                                      precision=hi) + p["b_ca2"])
        return r * s + d + xin                                         # RCAB + residual

    outs = [decode(enc[:, f], x[:, f]) for f in range(F)]
    return jnp.stack(outs, axis=1)


# ----------------------------------------------------------------------------
if __name__ == "__main__":
    B, F, H, W, nf = 2, 4, 16, 16, 8          # W*nf = 128 -> fully lane-dense I/O
    key = jax.random.PRNGKey(0)
    kx, kp = jax.random.split(key)
    x = jax.random.normal(kx, (B, F, H, W, nf), jnp.float32)
    params = init_params(kp, nf)

    out = jax.jit(progressive_fusion_block_4f_rcab)(x, params)
    out = jax.block_until_ready(out)

    ref = ref_forward(x, params)
    assert out.shape == (B, F, H, W, nf)
    err = float(jnp.max(jnp.abs(out - ref)))
    assert jnp.allclose(out, ref, atol=3e-3, rtol=3e-3), f"max abs err {err}"

    print("KERNEL_OK")
</pallas_src>

<mosaic_0001>
module attributes {stable_mosaic.version = 11 : i64} {
  func.func @_pf4_rcab_kernel(%arg0: i32, %arg1: memref<1x4x16x128xf32, #tpu.memory_space<vmem>>, %arg2: memref<1152x128xf32, #tpu.memory_space<vmem>>, %arg3: memref<1x128xf32, #tpu.memory_space<vmem>>, %arg4: memref<4x128x128xf32, #tpu.memory_space<vmem>>, %arg5: memref<1x128xf32, #tpu.memory_space<vmem>>, %arg6: memref<1152x128xf32, #tpu.memory_space<vmem>>, %arg7: memref<1152x128xf32, #tpu.memory_space<vmem>>, %arg8: memref<1x128xf32, #tpu.memory_space<vmem>>, %arg9: memref<1152x128xf32, #tpu.memory_space<vmem>>, %arg10: memref<1x128xf32, #tpu.memory_space<vmem>>, %arg11: memref<1152x128xf32, #tpu.memory_space<vmem>>, %arg12: memref<1x128xf32, #tpu.memory_space<vmem>>, %arg13: memref<8x128xf32, #tpu.memory_space<vmem>>, %arg14: memref<1x8xf32, #tpu.memory_space<vmem>>, %arg15: memref<8x128xf32, #tpu.memory_space<vmem>>, %arg16: memref<1x128xf32, #tpu.memory_space<vmem>>, %arg17: memref<1x4x16x128xf32, #tpu.memory_space<vmem>>, %arg18: memref<18x144xf32, #tpu.memory_space<vmem>>, %arg19: memref<64x1152xf32, #tpu.memory_space<vmem>>, %arg20: memref<64x128xf32, #tpu.memory_space<vmem>>) attributes {dimension_semantics = [#tpu.dimension_semantics<parallel>], iteration_bounds = array<i64: 2>, scalar_prefetch = 0 : i64, scratch_operands = 3 : i64, tpu.core_type = #tpu.core_type<tc>, window_params = [{transform_indices = @transform_0, window_bounds = array<i64: 1, 4, 16, 128>}, {pipeline_mode = #tpu.pipeline_mode<synchronous>, transform_indices = @transform_1, window_bounds = array<i64: 1152, 128>}, {pipeline_mode = #tpu.pipeline_mode<synchronous>, transform_indices = @transform_2, window_bounds = array<i64: 1, 128>}, {pipeline_mode = #tpu.pipeline_mode<synchronous>, transform_indices = @transform_3, window_bounds = array<i64: 4, 128, 128>}, {pipeline_mode = #tpu.pipeline_mode<synchronous>, transform_indices = @transform_4, window_bounds = array<i64: 1, 128>}, {pipeline_mode = #tpu.pipeline_mode<synchronous>, transform_indices = @transform_5, window_bounds = array<i64: 1152, 128>}, {pipeline_mode = #tpu.pipeline_mode<synchronous>, transform_indices = @transform_6, window_bounds = array<i64: 1152, 128>}, {pipeline_mode = #tpu.pipeline_mode<synchronous>, transform_indices = @transform_7, window_bounds = array<i64: 1, 128>}, {pipeline_mode = #tpu.pipeline_mode<synchronous>, transform_indices = @transform_8, window_bounds = array<i64: 1152, 128>}, {pipeline_mode = #tpu.pipeline_mode<synchronous>, transform_indices = @transform_9, window_bounds = array<i64: 1, 128>}, {pipeline_mode = #tpu.pipeline_mode<synchronous>, transform_indices = @transform_10, window_bounds = array<i64: 1152, 128>}, {pipeline_mode = #tpu.pipeline_mode<synchronous>, transform_indices = @transform_11, window_bounds = array<i64: 1, 128>}, {pipeline_mode = #tpu.pipeline_mode<synchronous>, transform_indices = @transform_12, window_bounds = array<i64: 8, 128>}, {pipeline_mode = #tpu.pipeline_mode<synchronous>, transform_indices = @transform_13, window_bounds = array<i64: 1, 8>}, {pipeline_mode = #tpu.pipeline_mode<synchronous>, transform_indices = @transform_14, window_bounds = array<i64: 8, 128>}, {pipeline_mode = #tpu.pipeline_mode<synchronous>, transform_indices = @transform_15, window_bounds = array<i64: 1, 128>}, {transform_indices = @transform_16, window_bounds = array<i64: 1, 4, 16, 128>}]} {
    %cst = arith.constant 0.000000e+00 : f32
    %0 = vector.broadcast %cst : f32 to vector<1x144xf32>
    %c0 = arith.constant 0 : index
    %c0_0 = arith.constant 0 : index
    %1 = vector.load %arg18[%c0, %c0_0] : memref<18x144xf32, #tpu.memory_space<vmem>>, vector<1x144xf32>
    tpu.vector_store %arg18[%c0, %c0_0], %0 {strides = array<i32>} : memref<18x144xf32, #tpu.memory_space<vmem>>, vector<1x144xf32>,
    %cst_1 = arith.constant 0.000000e+00 : f32
    %2 = vector.broadcast %cst_1 : f32 to vector<1x144xf32>
    %c17 = arith.constant 17 : index
    %c0_2 = arith.constant 0 : index
    %3 = vector.load %arg18[%c17, %c0_2] : memref<18x144xf32, #tpu.memory_space<vmem>>, vector<1x144xf32>
    tpu.vector_store %arg18[%c17, %c0_2], %2 {strides = array<i32>} : memref<18x144xf32, #tpu.memory_space<vmem>>, vector<1x144xf32>,
    %cst_3 = arith.constant 0.000000e+00 : f32
    %4 = vector.broadcast %cst_3 : f32 to vector<18x8xf32>
    %c0_4 = arith.constant 0 : index
    %c0_5 = arith.constant 0 : index
    %5 = vector.load %arg18[%c0_4, %c0_5] : memref<18x144xf32, #tpu.memory_space<vmem>>, vector<18x8xf32>
    tpu.vector_store %arg18[%c0_4, %c0_5], %4 {strides = array<i32>} : memref<18x144xf32, #tpu.memory_space<vmem>>, vector<18x8xf32>,
    %cst_6 = arith.constant 0.000000e+00 : f32
    %6 = vector.broadcast %cst_6 : f32 to vector<18x8xf32>
    %c0_7 = arith.constant 0 : index
    %c136 = arith.constant 136 : index
    %7 = vector.load %arg18[%c0_7, %c136] : memref<18x144xf32, #tpu.memory_space<vmem>>, vector<18x8xf32>
    tpu.vector_store %arg18[%c0_7, %c136], %6 {strides = array<i32>} : memref<18x144xf32, #tpu.memory_space<vmem>>, vector<18x8xf32>,
    %c0_8 = arith.constant 0 : index
    %c0_9 = arith.constant 0 : index
    %c0_10 = arith.constant 0 : index
    %c0_11 = arith.constant 0 : index
    %8 = vector.load %arg1[%c0_8, %c0_9, %c0_10, %c0_11] : memref<1x4x16x128xf32, #tpu.memory_space<vmem>>, vector<1x1x16x128xf32>
    %9 = vector.shape_cast %8 : vector<1x1x16x128xf32> to vector<16x128xf32>
    %c1 = arith.constant 1 : index
    %c8 = arith.constant 8 : index
    %10 = vector.load %arg18[%c1, %c8] : memref<18x144xf32, #tpu.memory_space<vmem>>, vector<16x128xf32>
    tpu.vector_store %arg18[%c1, %c8], %9 {strides = array<i32>} : memref<18x144xf32, #tpu.memory_space<vmem>>, vector<16x128xf32>,
    %c0_12 = arith.constant 0 : index
    %c0_13 = arith.constant 0 : index
    %11 = vector.load %arg18[%c0_12, %c0_13] : memref<18x144xf32, #tpu.memory_space<vmem>>, vector<16x128xf32>
    %c0_14 = arith.constant 0 : index
    %c0_15 = arith.constant 0 : index
    %12 = vector.load %arg19[%c0_14, %c0_15] : memref<64x1152xf32, #tpu.memory_space<vmem>>, vector<16x128xf32>
    tpu.vector_store %arg19[%c0_14, %c0_15], %11 {strides = array<i32>} : memref<64x1152xf32, #tpu.memory_space<vmem>>, vector<16x128xf32>,
    %c0_16 = arith.constant 0 : index
    %c8_17 = arith.constant 8 : index
    %13 = vector.load %arg18[%c0_16, %c8_17] : memref<18x144xf32, #tpu.memory_space<vmem>>, vector<16x128xf32>
    %c0_18 = arith.constant 0 : index
    %c128 = arith.constant 128 : index
    %14 = vector.load %arg19[%c0_18, %c128] : memref<64x1152xf32, #tpu.memory_space<vmem>>, vector<16x128xf32>
    tpu.vector_store %arg19[%c0_18, %c128], %13 {strides = array<i32>} : memref<64x1152xf32, #tpu.memory_space<vmem>>, vector<16x128xf32>,
    %c0_19 = arith.constant 0 : index
    %c16 = arith.constant 16 : index
    %15 = vector.load %arg18[%c0_19, %c16] : memref<18x144xf32, #tpu.memory_space<vmem>>, vector<16x128xf32>
    %c0_20 = arith.constant 0 : index
    %c256 = arith.constant 256 : index
    %16 = vector.load %arg19[%c0_20, %c256] : memref<64x1152xf32, #tpu.memory_space<vmem>>, vector<16x128xf32>
    tpu.vector_store %arg19[%c0_20, %c256], %15 {strides = array<i32>} : memref<64x1152xf32, #tpu.memory_space<vmem>>, vector<16x128xf32>,
    %c1_21 = arith.constant 1 : index
    %c0_22 = arith.constant 0 : index
    %17 = vector.load %arg18[%c1_21, %c0_22] : memref<18x144xf32, #tpu.memory_space<vmem>>, vector<16x128xf32>
    %c0_23 = arith.constant 0 : index
    %c384 = arith.constant 384 : index
    %18 = vector.load %arg19[%c0_23, %c384] : memref<64x1152xf32, #tpu.memory_space<vmem>>, vector<16x128xf32>
    tpu.vector_store %arg19[%c0_23, %c384], %17 {strides = array<i32>} : memref<64x1152xf32, #tpu.memory_space<vmem>>, vector<16x128xf32>,
    %c1_24 = arith.constant 1 : index
    %c8_25 = arith.constant 8 : index
    %19 = vector.load %arg18[%c1_24, %c8_25] : memref<18x144xf32, #tpu.memory_space<vmem>>, vector<16x128xf32>
    %c0_26 = arith.constant 0 : index
    %c512 = arith.constant 512 : index
    %20 = vector.load %arg19[%c0_26, %c512] : memref<64x1152xf32, #tpu.memory_space<vmem>>, vector<16x128xf32>
    tpu.vector_store %arg19[%c0_26, %c512], %19 {strides = array<i32>} : memref<64x1152xf32, #tpu.memory_space<vmem>>, vector<16x128xf32>,
    %c1_27 = arith.constant 1 : index
    %c16_28 = arith.constant 16 : index
    %21 = vector.load %arg18[%c1_27, %c16_28] : memref<18x144xf32, #tpu.memory_space<vmem>>, vector<16x128xf32>
    %c0_29 = arith.constant 0 : index
    %c640 = arith.constant 640 : index
    %22 = vector.load %arg19[%c0_29, %c640] : memref<64x1152xf32, #tpu.memory_space<vmem>>, vector<16x128xf32>
    tpu.vector_store %arg19[%c0_29, %c640], %21 {strides = array<i32>} : memref<64x1152xf32, #tpu.memory_space<vmem>>, vector<16x128xf32>,
    %c2 = arith.constant 2 : index
    %c0_30 = arith.constant 0 : index
    %23 = vector.load %arg18[%c2, %c0_30] : memref<18x144xf32, #tpu.memory_space<vmem>>, vector<16x128xf32>
    %c0_31 = arith.constant 0 : index
    %c768 = arith.constant 768 : index
    %24 = vector.load %arg19[%c0_31, %c768] : memref<64x1152xf32, #tpu.memory_space<vmem>>, vector<16x128xf32>
    tpu.vector_store %arg19[%c0_31, %c768], %23 {strides = array<i32>} : memref<64x1152xf32, #tpu.memory_space<vmem>>, vector<16x128xf32>,
    %c2_32 = arith.constant 2 : index
    %c8_33 = arith.constant 8 : index
    %25 = vector.load %arg18[%c2_32, %c8_33] : memref<18x144xf32, #tpu.memory_space<vmem>>, vector<16x128xf32>
    %c0_34 = arith.constant 0 : index
    %c896 = arith.constant 896 : index
    %26 = vector.load %arg19[%c0_34, %c896] : memref<64x1152xf32, #tpu.memory_space<vmem>>, vector<16x128xf32>
    tpu.vector_store %arg19[%c0_34, %c896], %25 {strides = array<i32>} : memref<64x1152xf32, #tpu.memory_space<vmem>>, vector<16x128xf32>,
    %c2_35 = arith.constant 2 : index
    %c16_36 = arith.constant 16 : index
    %27 = vector.load %arg18[%c2_35, %c16_36] : memref<18x144xf32, #tpu.memory_space<vmem>>, vector<16x128xf32>
    %c0_37 = arith.constant 0 : index
    %c1024 = arith.constant 1024 : index
    %28 = vector.load %arg19[%c0_37, %c1024] : memref<64x1152xf32, #tpu.memory_space<vmem>>, vector<16x128xf32>
    tpu.vector_store %arg19[%c0_37, %c1024], %27 {strides = array<i32>} : memref<64x1152xf32, #tpu.memory_space<vmem>>, vector<16x128xf32>,
    %c0_38 = arith.constant 0 : index
    %c1_39 = arith.constant 1 : index
    %c0_40 = arith.constant 0 : index
    %c0_41 = arith.constant 0 : index
    %29 = vector.load %arg1[%c0_38, %c1_39, %c0_40, %c0_41] : memref<1x4x16x128xf32, #tpu.memory_space<vmem>>, vector<1x1x16x128xf32>
    %30 = vector.shape_cast %29 : vector<1x1x16x128xf32> to vector<16x128xf32>
    %c1_42 = arith.constant 1 : index
    %c8_43 = arith.constant 8 : index
    %31 = vector.load %arg18[%c1_42, %c8_43] : memref<18x144xf32, #tpu.memory_space<vmem>>, vector<16x128xf32>
    tpu.vector_store %arg18[%c1_42, %c8_43], %30 {strides = array<i32>} : memref<18x144xf32, #tpu.memory_space<vmem>>, vector<16x128xf32>,
    %c0_44 = arith.constant 0 : index
    %c0_45 = arith.constant 0 : index
    %32 = vector.load %arg18[%c0_44, %c0_45] : memref<18x144xf32, #tpu.memory_space<vmem>>, vector<16x128xf32>
    %c16_46 = arith.constant 16 : index
    %c0_47 = arith.constant 0 : index
    %33 = vector.load %arg19[%c16_46, %c0_47] : memref<64x1152xf32, #tpu.memory_space<vmem>>, vector<16x128xf32>
    tpu.vector_store %arg19[%c16_46, %c0_47], %32 {strides = array<i32>} : memref<64x1152xf32, #tpu.memory_space<vmem>>, vector<16x128xf32>,
    %c0_48 = arith.constant 0 : index
    %c8_49 = arith.constant 8 : index
    %34 = vector.load %arg18[%c0_48, %c8_49] : memref<18x144xf32, #tpu.memory_space<vmem>>, vector<16x128xf32>
    %c16_50 = arith.constant 16 : index
    %c128_51 = arith.constant 128 : index
    %35 = vector.load %arg19[%c16_50, %c128_51] : memref<64x1152xf32, #tpu.memory_space<vmem>>, vector<16x128xf32>
    tpu.vector_store %arg19[%c16_50, %c128_51], %34 {strides = array<i32>} : memref<64x1152xf32, #tpu.memory_space<vmem>>, vector<16x128xf32>,
    %c0_52 = arith.constant 0 : index
    %c16_53 = arith.constant 16 : index
    %36 = vector.load %arg18[%c0_52, %c16_53] : memref<18x144xf32, #tpu.memory_space<vmem>>, vector<16x128xf32>
    %c16_54 = arith.constant 16 : index
    %c256_55 = arith.constant 256 : index
    %37 = vector.load %arg19[%c16_54, %c256_55] : memref<64x1152xf32, #tpu.memory_space<vmem>>, vector<16x128xf32>
    tpu.vector_store %arg19[%c16_54, %c256_55], %36 {strides = array<i32>} : memref<64x1152xf32, #tpu.memory_space<vmem>>, vector<16x128xf32>,
    %c1_56 = arith.constant 1 : index
    %c0_57 = arith.constant 0 : index
    %38 = vector.load %arg18[%c1_56, %c0_57] : memref<18x144xf32, #tpu.memory_space<vmem>>, vector<16x128xf32>
    %c16_58 = arith.constant 16 : index
    %c384_59 = arith.constant 384 : index
    %39 = vector.load %arg19[%c16_58, %c384_59] : memref<64x1152xf32, #tpu.memory_space<vmem>>, vector<16x128xf32>
    tpu.vector_store %arg19[%c16_58, %c384_59], %38 {strides = array<i32>} : memref<64x1152xf32, #tpu.memory_space<vmem>>, vector<16x128xf32>,
    %c1_60 = arith.constant 1 : index
    %c8_61 = arith.constant 8 : index
    %40 = vector.load %arg18[%c1_60, %c8_61] : memref<18x144xf32, #tpu.memory_space<vmem>>, vector<16x128xf32>
    %c16_62 = arith.constant 16 : index
    %c512_63 = arith.constant 512 : index
    %41 = vector.load %arg19[%c16_62, %c512_63] : memref<64x1152xf32, #tpu.memory_space<vmem>>, vector<16x128xf32>
    tpu.vector_store %arg19[%c16_62, %c512_63], %40 {strides = array<i32>} : memref<64x1152xf32, #tpu.memory_space<vmem>>, vector<16x128xf32>,
    %c1_64 = arith.constant 1 : index
    %c16_65 = arith.constant 16 : index
    %42 = vector.load %arg18[%c1_64, %c16_65] : memref<18x144xf32, #tpu.memory_space<vmem>>, vector<16x128xf32>
    %c16_66 = arith.constant 16 : index
    %c640_67 = arith.constant 640 : index
    %43 = vector.load %arg19[%c16_66, %c640_67] : memref<64x1152xf32, #tpu.memory_space<vmem>>, vector<16x128xf32>
    tpu.vector_store %arg19[%c16_66, %c640_67], %42 {strides = array<i32>} : memref<64x1152xf32, #tpu.memory_space<vmem>>, vector<16x128xf32>,
    %c2_68 = arith.constant 2 : index
    %c0_69 = arith.constant 0 : index
    %44 = vector.load %arg18[%c2_68, %c0_69] : memref<18x144xf32, #tpu.memory_space<vmem>>, vector<16x128xf32>
    %c16_70 = arith.constant 16 : index
    %c768_71 = arith.constant 768 : index
    %45 = vector.load %arg19[%c16_70, %c768_71] : memref<64x1152xf32, #tpu.memory_space<vmem>>, vector<16x128xf32>
    tpu.vector_store %arg19[%c16_70, %c768_71], %44 {strides = array<i32>} : memref<64x1152xf32, #tpu.memory_space<vmem>>, vector<16x128xf32>,
    %c2_72 = arith.constant 2 : index
    %c8_73 = arith.constant 8 : index
    %46 = vector.load %arg18[%c2_72, %c8_73] : memref<18x144xf32, #tpu.memory_space<vmem>>, vector<16x128xf32>
    %c16_74 = arith.constant 16 : index
    %c896_75 = arith.constant 896 : index
    %47 = vector.load %arg19[%c16_74, %c896_75] : memref<64x1152xf32, #tpu.memory_space<vmem>>, vector<16x128xf32>
    tpu.vector_store %arg19[%c16_74, %c896_75], %46 {strides = array<i32>} : memref<64x1152xf32, #tpu.memory_space<vmem>>, vector<16x128xf32>,
    %c2_76 = arith.constant 2 : index
    %c16_77 = arith.constant 16 : index
    %48 = vector.load %arg18[%c2_76, %c16_77] : memref<18x144xf32, #tpu.memory_space<vmem>>, vector<16x128xf32>
    %c16_78 = arith.constant 16 : index
    %c1024_79 = arith.constant 1024 : index
    %49 = vector.load %arg19[%c16_78, %c1024_79] : memref<64x1152xf32, #tpu.memory_space<vmem>>, vector<16x128xf32>
    tpu.vector_store %arg19[%c16_78, %c1024_79], %48 {strides = array<i32>} : memref<64x1152xf32, #tpu.memory_space<vmem>>, vector<16x128xf32>,
    %c0_80 = arith.constant 0 : index
    %c2_81 = arith.constant 2 : index
    %c0_82 = arith.constant 0 : index
    %c0_83 = arith.constant 0 : index
    %50 = vector.load %arg1[%c0_80, %c2_81, %c0_82, %c0_83] : memref<1x4x16x128xf32, #tpu.memory_space<vmem>>, vector<1x1x16x128xf32>
    %51 = vector.shape_cast %50 : vector<1x1x16x128xf32> to vector<16x128xf32>
    %c1_84 = arith.constant 1 : index
    %c8_85 = arith.constant 8 : index
    %52 = vector.load %arg18[%c1_84, %c8_85] : memref<18x144xf32, #tpu.memory_space<vmem>>, vector<16x128xf32>
    tpu.vector_store %arg18[%c1_84, %c8_85], %51 {strides = array<i32>} : memref<18x144xf32, #tpu.memory_space<vmem>>, vector<16x128xf32>,
    %c0_86 = arith.constant 0 : index
    %c0_87 = arith.constant 0 : index
    %53 = vector.load %arg18[%c0_86, %c0_87] : memref<18x144xf32, #tpu.memory_space<vmem>>, vector<16x128xf32>
    %c32 = arith.constant 32 : index
    %c0_88 = arith.constant 0 : index
    %54 = vector.load %arg19[%c32, %c0_88] : memref<64x1152xf32, #tpu.memory_space<vmem>>, vector<16x128xf32>
    tpu.vector_store %arg19[%c32, %c0_88], %53 {strides = array<i32>} : memref<64x1152xf32, #tpu.memory_space<vmem>>, vector<16x128xf32>,
    %c0_89 = arith.constant 0 : index
    %c8_90 = arith.constant 8 : index
    %55 = vector.load %arg18[%c0_89, %c8_90] : memref<18x144xf32, #tpu.memory_space<vmem>>, vector<16x128xf32>
    %c32_91 = arith.constant 32 : index
    %c128_92 = arith.constant 128 : index
    %56 = vector.load %arg19[%c32_91, %c128_92] : memref<64x1152xf32, #tpu.memory_space<vmem>>, vector<16x128xf32>
    tpu.vector_store %arg19[%c32_91, %c128_92], %55 {strides = array<i32>} : memref<64x1152xf32, #tpu.memory_space<vmem>>, vector<16x128xf32>,
    %c0_93 = arith.constant 0 : index
    %c16_94 = arith.constant 16 : index
    %57 = vector.load %arg18[%c0_93, %c16_94] : memref<18x144xf32, #tpu.memory_space<vmem>>, vector<16x128xf32>
    %c32_95 = arith.constant 32 : index
    %c256_96 = arith.constant 256 : index
    %58 = vector.load %arg19[%c32_95, %c256_96] : memref<64x1152xf32, #tpu.memory_space<vmem>>, vector<16x128xf32>
    tpu.vector_store %arg19[%c32_95, %c256_96], %57 {strides = array<i32>} : memref<64x1152xf32, #tpu.memory_space<vmem>>, vector<16x128xf32>,
    %c1_97 = arith.constant 1 : index
    %c0_98 = arith.constant 0 : index
    %59 = vector.load %arg18[%c1_97, %c0_98] : memref<18x144xf32, #tpu.memory_space<vmem>>, vector<16x128xf32>
    %c32_99 = arith.constant 32 : index
    %c384_100 = arith.constant 384 : index
    %60 = vector.load %arg19[%c32_99, %c384_100] : memref<64x1152xf32, #tpu.memory_space<vmem>>, vector<16x128xf32>
    tpu.vector_store %arg19[%c32_99, %c384_100], %59 {strides = array<i32>} : memref<64x1152xf32, #tpu.memory_space<vmem>>, vector<16x128xf32>,
    %c1_101 = arith.constant 1 : index
    %c8_102 = arith.constant 8 : index
    %61 = vector.load %arg18[%c1_101, %c8_102] : memref<18x144xf32, #tpu.memory_space<vmem>>, vector<16x128xf32>
    %c32_103 = arith.constant 32 : index
    %c512_104 = arith.constant 512 : index
    %62 = vector.load %arg19[%c32_103, %c512_104] : memref<64x1152xf32, #tpu.memory_space<vmem>>, vector<16x128xf32>
    tpu.vector_store %arg19[%c32_103, %c512_104], %61 {strides = array<i32>} : memref<64x1152xf32, #tpu.memory_space<vmem>>, vector<16x128xf32>,
    %c1_105 = arith.constant 1 : index
    %c16_106 = arith.constant 16 : index
    %63 = vector.load %arg18[%c1_105, %c16_106] : memref<18x144xf32, #tpu.memory_space<vmem>>, vector<16x128xf32>
    %c32_107 = arith.constant 32 : index
    %c640_108 = arith.constant 640 : index
    %64 = vector.load %arg19[%c32_107, %c640_108] : memref<64x1152xf32, #tpu.memory_space<vmem>>, vector<16x128xf32>
    tpu.vector_store %arg19[%c32_107, %c640_108], %63 {strides = array<i32>} : memref<64x1152xf32, #tpu.memory_space<vmem>>, vector<16x128xf32>,
    %c2_109 = arith.constant 2 : index
    %c0_110 = arith.constant 0 : index
    %65 = vector.load %arg18[%c2_109, %c0_110] : memref<18x144xf32, #tpu.memory_space<vmem>>, vector<16x128xf32>
    %c32_111 = arith.constant 32 : index
    %c768_112 = arith.constant 768 : index
    %66 = vector.load %arg19[%c32_111, %c768_112] : memref<64x1152xf32, #tpu.memory_space<vmem>>, vector<16x128xf32>
    tpu.vector_store %arg19[%c32_111, %c768_112], %65 {strides = array<i32>} : memref<64x1152xf32, #tpu.memory_space<vmem>>, vector<16x128xf32>,
    %c2_113 = arith.constant 2 : index
    %c8_114 = arith.constant 8 : index
    %67 = vector.load %arg18[%c2_113, %c8_114] : memref<18x144xf32, #tpu.memory_space<vmem>>, vector<16x128xf32>
    %c32_115 = arith.constant 32 : index
    %c896_116 = arith.constant 896 : index
    %68 = vector.load %arg19[%c32_115, %c896_116] : memref<64x1152xf32, #tpu.memory_space<vmem>>, vector<16x128xf32>
    tpu.vector_store %arg19[%c32_115, %c896_116], %67 {strides = array<i32>} : memref<64x1152xf32, #tpu.memory_space<vmem>>, vector<16x128xf32>,
    %c2_117 = arith.constant 2 : index
    %c16_118 = arith.constant 16 : index
    %69 = vector.load %arg18[%c2_117, %c16_118] : memref<18x144xf32, #tpu.memory_space<vmem>>, vector<16x128xf32>
    %c32_119 = arith.constant 32 : index
    %c1024_120 = arith.constant 1024 : index
    %70 = vector.load %arg19[%c32_119, %c1024_120] : memref<64x1152xf32, #tpu.memory_space<vmem>>, vector<16x128xf32>
    tpu.vector_store %arg19[%c32_119, %c1024_120], %69 {strides = array<i32>} : memref<64x1152xf32, #tpu.memory_space<vmem>>, vector<16x128xf32>,
    %c0_121 = arith.constant 0 : index
    %c3 = arith.constant 3 : index
    %c0_122 = arith.constant 0 : index
    %c0_123 = arith.constant 0 : index
    %71 = vector.load %arg1[%c0_121, %c3, %c0_122, %c0_123] : memref<1x4x16x128xf32, #tpu.memory_space<vmem>>, vector<1x1x16x128xf32>
    %72 = vector.shape_cast %71 : vector<1x1x16x128xf32> to vector<16x128xf32>
    %c1_124 = arith.constant 1 : index
    %c8_125 = arith.constant 8 : index
    %73 = vector.load %arg18[%c1_124, %c8_125] : memref<18x144xf32, #tpu.memory_space<vmem>>, vector<16x128xf32>
    tpu.vector_store %arg18[%c1_124, %c8_125], %72 {strides = array<i32>} : memref<18x144xf32, #tpu.memory_space<vmem>>, vector<16x128xf32>,
    %c0_126 = arith.constant 0 : index
    %c0_127 = arith.constant 0 : index
    %74 = vector.load %arg18[%c0_126, %c0_127] : memref<18x144xf32, #tpu.memory_space<vmem>>, vector<16x128xf32>
    %c48 = arith.constant 48 : index
    %c0_128 = arith.constant 0 : index
    %75 = vector.load %arg19[%c48, %c0_128] : memref<64x1152xf32, #tpu.memory_space<vmem>>, vector<16x128xf32>
    tpu.vector_store %arg19[%c48, %c0_128], %74 {strides = array<i32>} : memref<64x1152xf32, #tpu.memory_space<vmem>>, vector<16x128xf32>,
    %c0_129 = arith.constant 0 : index
    %c8_130 = arith.constant 8 : index
    %76 = vector.load %arg18[%c0_129, %c8_130] : memref<18x144xf32, #tpu.memory_space<vmem>>, vector<16x128xf32>
    %c48_131 = arith.constant 48 : index
    %c128_132 = arith.constant 128 : index
    %77 = vector.load %arg19[%c48_131, %c128_132] : memref<64x1152xf32, #tpu.memory_space<vmem>>, vector<16x128xf32>
    tpu.vector_store %arg19[%c48_131, %c128_132], %76 {strides = array<i32>} : memref<64x1152xf32, #tpu.memory_space<vmem>>, vector<16x128xf32>,
    %c0_133 = arith.constant 0 : index
    %c16_134 = arith.constant 16 : index
    %78 = vector.load %arg18[%c0_133, %c16_134] : memref<18x144xf32, #tpu.memory_space<vmem>>, vector<16x128xf32>
    %c48_135 = arith.constant 48 : index
    %c256_136 = arith.constant 256 : index
    %79 = vector.load %arg19[%c48_135, %c256_136] : memref<64x1152xf32, #tpu.memory_space<vmem>>, vector<16x128xf32>
    tpu.vector_store %arg19[%c48_135, %c256_136], %78 {strides = array<i32>} : memref<64x1152xf32, #tpu.memory_space<vmem>>, vector<16x128xf32>,
    %c1_137 = arith.constant 1 : index
    %c0_138 = arith.constant 0 : index
    %80 = vector.load %arg18[%c1_137, %c0_138] : memref<18x144xf32, #tpu.memory_space<vmem>>, vector<16x128xf32>
    %c48_139 = arith.constant 48 : index
    %c384_140 = arith.constant 384 : index
    %81 = vector.load %arg19[%c48_139, %c384_140] : memref<64x1152xf32, #tpu.memory_space<vmem>>, vector<16x128xf32>
    tpu.vector_store %arg19[%c48_139, %c384_140], %80 {strides = array<i32>} : memref<64x1152xf32, #tpu.memory_space<vmem>>, vector<16x128xf32>,
    %c1_141 = arith.constant 1 : index
    %c8_142 = arith.constant 8 : index
    %82 = vector.load %arg18[%c1_141, %c8_142] : memref<18x144xf32, #tpu.memory_space<vmem>>, vector<16x128xf32>
    %c48_143 = arith.constant 48 : index
    %c512_144 = arith.constant 512 : index
    %83 = vector.load %arg19[%c48_143, %c512_144] : memref<64x1152xf32, #tpu.memory_space<vmem>>, vector<16x128xf32>
    tpu.vector_store %arg19[%c48_143, %c512_144], %82 {strides = array<i32>} : memref<64x1152xf32, #tpu.memory_space<vmem>>, vector<16x128xf32>,
    %c1_145 = arith.constant 1 : index
    %c16_146 = arith.constant 16 : index
    %84 = vector.load %arg18[%c1_145, %c16_146] : memref<18x144xf32, #tpu.memory_space<vmem>>, vector<16x128xf32>
    %c48_147 = arith.constant 48 : index
    %c640_148 = arith.constant 640 : index
    %85 = vector.load %arg19[%c48_147, %c640_148] : memref<64x1152xf32, #tpu.memory_space<vmem>>, vector<16x128xf32>
    tpu.vector_store %arg19[%c48_147, %c640_148], %84 {strides = array<i32>} : memref<64x1152xf32, #tpu.memory_space<vmem>>, vector<16x128xf32>,
    %c2_149 = arith.constant 2 : index
    %c0_150 = arith.constant 0 : index
    %86 = vector.load %arg18[%c2_149, %c0_150] : memref<18x144xf32, #tpu.memory_space<vmem>>, vector<16x128xf32>
    %c48_151 = arith.constant 48 : index
    %c768_152 = arith.constant 768 : index
    %87 = vector.load %arg19[%c48_151, %c768_152] : memref<64x1152xf32, #tpu.memory_space<vmem>>, vector<16x128xf32>
    tpu.vector_store %arg19[%c48_151, %c768_152], %86 {strides = array<i32>} : memref<64x1152xf32, #tpu.memory_space<vmem>>, vector<16x128xf32>,
    %c2_153 = arith.constant 2 : index
    %c8_154 = arith.constant 8 : index
    %88 = vector.load %arg18[%c2_153, %c8_154] : memref<18x144xf32, #tpu.memory_space<vmem>>, vector<16x128xf32>
    %c48_155 = arith.constant 48 : index
    %c896_156 = arith.constant 896 : index
    %89 = vector.load %arg19[%c48_155, %c896_156] : memref<64x1152xf32, #tpu.memory_space<vmem>>, vector<16x128xf32>
    tpu.vector_store %arg19[%c48_155, %c896_156], %88 {strides = array<i32>} : memref<64x1152xf32, #tpu.memory_space<vmem>>, vector<16x128xf32>,
    %c2_157 = arith.constant 2 : index
    %c16_158 = arith.constant 16 : index
    %90 = vector.load %arg18[%c2_157, %c16_158] : memref<18x144xf32, #tpu.memory_space<vmem>>, vector<16x128xf32>
    %c48_159 = arith.constant 48 : index
    %c1024_160 = arith.constant 1024 : index
    %91 = vector.load %arg19[%c48_159, %c1024_160] : memref<64x1152xf32, #tpu.memory_space<vmem>>, vector<16x128xf32>
    tpu.vector_store %arg19[%c48_159, %c1024_160], %90 {strides = array<i32>} : memref<64x1152xf32, #tpu.memory_space<vmem>>, vector<16x128xf32>,
    %c0_161 = arith.constant 0 : index
    %c0_162 = arith.constant 0 : index
    %92 = vector.load %arg19[%c0_161, %c0_162] : memref<64x1152xf32, #tpu.memory_space<vmem>>, vector<64x1152xf32>
    %c0_163 = arith.constant 0 : index
    %c0_164 = arith.constant 0 : index
    %93 = vector.load %arg2[%c0_163, %c0_164] : memref<1152x128xf32, #tpu.memory_space<vmem>>, vector<1152x128xf32>
    %cst_165 = arith.constant dense<0.000000e+00> : vector<64x128xf32>
    %94 = tpu.matmul %92, %93, %cst_165 {dimension_numbers = #tpu.dot_dimension_numbers<[1], [0], [0], [1], [0, 0, 1, 1], [], []>} : vector<64x1152xf32>, vector<1152x128xf32>, vector<64x128xf32> -> vector<64x128xf32>
    %c0_166 = arith.constant 0 : index
    %c0_167 = arith.constant 0 : index
    %95 = vector.load %arg3[%c0_166, %c0_167] : memref<1x128xf32, #tpu.memory_space<vmem>>, vector<1x128xf32>
    %96 = vector.broadcast %95 : vector<1x128xf32> to vector<64x128xf32>
    %97 = arith.addf %94, %96 : vector<64x128xf32>
    %cst_168 = arith.constant 0.000000e+00 : f32
    %98 = vector.broadcast %cst_168 : f32 to vector<64x128xf32>
    %99 = arith.cmpf oge, %97, %98 : vector<64x128xf32>
    %cst_169 = arith.constant 1.000000e-01 : f32
    %100 = vector.broadcast %cst_169 : f32 to vector<64x128xf32>
    %101 = arith.mulf %100, %97 : vector<64x128xf32>
    %102 = arith.select %99, %97, %101 : vector<64x128xi1>, vector<64x128xf32>
    %c0_170 = arith.constant 0 : index
    %c0_171 = arith.constant 0 : index
    %103 = vector.load %arg20[%c0_170, %c0_171] : memref<64x128xf32, #tpu.memory_space<vmem>>, vector<64x128xf32>
    tpu.vector_store %arg20[%c0_170, %c0_171], %102 {strides = array<i32>} : memref<64x128xf32, #tpu.memory_space<vmem>>, vector<64x128xf32>,
    %c0_172 = arith.constant 0 : index
    %c0_173 = arith.constant 0 : index
    %104 = vector.load %arg20[%c0_172, %c0_173] : memref<64x128xf32, #tpu.memory_space<vmem>>, vector<16x128xf32>
    %c0_174 = arith.constant 0 : index
    %c0_175 = arith.constant 0 : index
    %c0_176 = arith.constant 0 : index
    %105 = vector.load %arg4[%c0_174, %c0_175, %c0_176] : memref<4x128x128xf32, #tpu.memory_space<vmem>>, vector<1x128x128xf32>
    %106 = vector.shape_cast %105 : vector<1x128x128xf32> to vector<128x128xf32>
    %cst_177 = arith.constant dense<0.000000e+00> : vector<16x128xf32>
    %107 = tpu.matmul %104, %106, %cst_177 {dimension_numbers = #tpu.dot_dimension_numbers<[1], [0], [0], [1], [0, 0, 1, 1], [], []>} : vector<16x128xf32>, vector<128x128xf32>, vector<16x128xf32> -> vector<16x128xf32>
    %c16_178 = arith.constant 16 : index
    %c0_179 = arith.constant 0 : index
    %108 = vector.load %arg20[%c16_178, %c0_179] : memref<64x128xf32, #tpu.memory_space<vmem>>, vector<16x128xf32>
    %c1_180 = arith.constant 1 : index
    %c0_181 = arith.constant 0 : index
    %c0_182 = arith.constant 0 : index
    %109 = vector.load %arg4[%c1_180, %c0_181, %c0_182] : memref<4x128x128xf32, #tpu.memory_space<vmem>>, vector<1x128x128xf32>
    %110 = vector.shape_cast %109 : vector<1x128x128xf32> to vector<128x128xf32>
    %cst_183 = arith.constant dense<0.000000e+00> : vector<16x128xf32>
    %111 = tpu.matmul %108, %110, %cst_183 {dimension_numbers = #tpu.dot_dimension_numbers<[1], [0], [0], [1], [0, 0, 1, 1], [], []>} : vector<16x128xf32>, vector<128x128xf32>, vector<16x128xf32> -> vector<16x128xf32>
    %112 = arith.addf %107, %111 : vector<16x128xf32>
    %c32_184 = arith.constant 32 : index
    %c0_185 = arith.constant 0 : index
    %113 = vector.load %arg20[%c32_184, %c0_185] : memref<64x128xf32, #tpu.memory_space<vmem>>, vector<16x128xf32>
    %c2_186 = arith.constant 2 : index
    %c0_187 = arith.constant 0 : index
    %c0_188 = arith.constant 0 : index
    %114 = vector.load %arg4[%c2_186, %c0_187, %c0_188] : memref<4x128x128xf32, #tpu.memory_space<vmem>>, vector<1x128x128xf32>
    %115 = vector.shape_cast %114 : vector<1x128x128xf32> to vector<128x128xf32>
    %cst_189 = arith.constant dense<0.000000e+00> : vector<16x128xf32>
    %116 = tpu.matmul %113, %115, %cst_189 {dimension_numbers = #tpu.dot_dimension_numbers<[1], [0], [0], [1], [0, 0, 1, 1], [], []>} : vector<16x128xf32>, vector<128x128xf32>, vector<16x128xf32> -> vector<16x128xf32>
    %117 = arith.addf %112, %116 : vector<16x128xf32>
    %c48_190 = arith.constant 48 : index
    %c0_191 = arith.constant 0 : index
    %118 = vector.load %arg20[%c48_190, %c0_191] : memref<64x128xf32, #tpu.memory_space<vmem>>, vector<16x128xf32>
    %c3_192 = arith.constant 3 : index
    %c0_193 = arith.constant 0 : index
    %c0_194 = arith.constant 0 : index
    %119 = vector.load %arg4[%c3_192, %c0_193, %c0_194] : memref<4x128x128xf32, #tpu.memory_space<vmem>>, vector<1x128x128xf32>
    %120 = vector.shape_cast %119 : vector<1x128x128xf32> to vector<128x128xf32>
    %cst_195 = arith.constant dense<0.000000e+00> : vector<16x128xf32>
    %121 = tpu.matmul %118, %120, %cst_195 {dimension_numbers = #tpu.dot_dimension_numbers<[1], [0], [0], [1], [0, 0, 1, 1], [], []>} : vector<16x128xf32>, vector<128x128xf32>, vector<16x128xf32> -> vector<16x128xf32>
    %122 = arith.addf %117, %121 : vector<16x128xf32>
    %c0_196 = arith.constant 0 : index
    %c0_197 = arith.constant 0 : index
    %123 = vector.load %arg5[%c0_196, %c0_197] : memref<1x128xf32, #tpu.memory_space<vmem>>, vector<1x128xf32>
    %124 = vector.broadcast %123 : vector<1x128xf32> to vector<16x128xf32>
    %125 = arith.addf %122, %124 : vector<16x128xf32>
    %c1_198 = arith.constant 1 : index
    %c8_199 = arith.constant 8 : index
    %126 = vector.load %arg18[%c1_198, %c8_199] : memref<18x144xf32, #tpu.memory_space<vmem>>, vector<16x128xf32>
    tpu.vector_store %arg18[%c1_198, %c8_199], %125 {strides = array<i32>} : memref<18x144xf32, #tpu.memory_space<vmem>>, vector<16x128xf32>,
    %c0_200 = arith.constant 0 : index
    %c0_201 = arith.constant 0 : index
    %127 = vector.load %arg18[%c0_200, %c0_201] : memref<18x144xf32, #tpu.memory_space<vmem>>, vector<16x128xf32>
    %c0_202 = arith.constant 0 : index
    %c0_203 = arith.constant 0 : index
    %128 = vector.load %arg19[%c0_202, %c0_203] : memref<64x1152xf32, #tpu.memory_space<vmem>>, vector<16x128xf32>
    tpu.vector_store %arg19[%c0_202, %c0_203], %127 {strides = array<i32>} : memref<64x1152xf32, #tpu.memory_space<vmem>>, vector<16x128xf32>,
    %c0_204 = arith.constant 0 : index
    %c8_205 = arith.constant 8 : index
    %129 = vector.load %arg18[%c0_204, %c8_205] : memref<18x144xf32, #tpu.memory_space<vmem>>, vector<16x128xf32>
    %c0_206 = arith.constant 0 : index
    %c128_207 = arith.constant 128 : index
    %130 = vector.load %arg19[%c0_206, %c128_207] : memref<64x1152xf32, #tpu.memory_space<vmem>>, vector<16x128xf32>
    tpu.vector_store %arg19[%c0_206, %c128_207], %129 {strides = array<i32>} : memref<64x1152xf32, #tpu.memory_space<vmem>>, vector<16x128xf32>,
    %c0_208 = arith.constant 0 : index
    %c16_209 = arith.constant 16 : index
    %131 = vector.load %arg18[%c0_208, %c16_209] : memref<18x144xf32, #tpu.memory_space<vmem>>, vector<16x128xf32>
    %c0_210 = arith.constant 0 : index
    %c256_211 = arith.constant 256 : index
    %132 = vector.load %arg19[%c0_210, %c256_211] : memref<64x1152xf32, #tpu.memory_space<vmem>>, vector<16x128xf32>
    tpu.vector_store %arg19[%c0_210, %c256_211], %131 {strides = array<i32>} : memref<64x1152xf32, #tpu.memory_space<vmem>>, vector<16x128xf32>,
    %c1_212 = arith.constant 1 : index
    %c0_213 = arith.constant 0 : index
    %133 = vector.load %arg18[%c1_212, %c0_213] : memref<18x144xf32, #tpu.memory_space<vmem>>, vector<16x128xf32>
    %c0_214 = arith.constant 0 : index
    %c384_215 = arith.constant 384 : index
    %134 = vector.load %arg19[%c0_214, %c384_215] : memref<64x1152xf32, #tpu.memory_space<vmem>>, vector<16x128xf32>
    tpu.vector_store %arg19[%c0_214, %c384_215], %133 {strides = array<i32>} : memref<64x1152xf32, #tpu.memory_space<vmem>>, vector<16x128xf32>,
    %c1_216 = arith.constant 1 : index
    %c8_217 = arith.constant 8 : index
    %135 = vector.load %arg18[%c1_216, %c8_217] : memref<18x144xf32, #tpu.memory_space<vmem>>, vector<16x128xf32>
    %c0_218 = arith.constant 0 : index
    %c512_219 = arith.constant 512 : index
    %136 = vector.load %arg19[%c0_218, %c512_219] : memref<64x1152xf32, #tpu.memory_space<vmem>>, vector<16x128xf32>
    tpu.vector_store %arg19[%c0_218, %c512_219], %135 {strides = array<i32>} : memref<64x1152xf32, #tpu.memory_space<vmem>>, vector<16x128xf32>,
    %c1_220 = arith.constant 1 : index
    %c16_221 = arith.constant 16 : index
    %137 = vector.load %arg18[%c1_220, %c16_221] : memref<18x144xf32, #tpu.memory_space<vmem>>, vector<16x128xf32>
    %c0_222 = arith.constant 0 : index
    %c640_223 = arith.constant 640 : index
    %138 = vector.load %arg19[%c0_222, %c640_223] : memref<64x1152xf32, #tpu.memory_space<vmem>>, vector<16x128xf32>
    tpu.vector_store %arg19[%c0_222, %c640_223], %137 {strides = array<i32>} : memref<64x1152xf32, #tpu.memory_space<vmem>>, vector<16x128xf32>,
    %c2_224 = arith.constant 2 : index
    %c0_225 = arith.constant 0 : index
    %139 = vector.load %arg18[%c2_224, %c0_225] : memref<18x144xf32, #tpu.memory_space<vmem>>, vector<16x128xf32>
    %c0_226 = arith.constant 0 : index
    %c768_227 = arith.constant 768 : index
    %140 = vector.load %arg19[%c0_226, %c768_227] : memref<64x1152xf32, #tpu.memory_space<vmem>>, vector<16x128xf32>
    tpu.vector_store %arg19[%c0_226, %c768_227], %139 {strides = array<i32>} : memref<64x1152xf32, #tpu.memory_space<vmem>>, vector<16x128xf32>,
    %c2_228 = arith.constant 2 : index
    %c8_229 = arith.constant 8 : index
    %141 = vector.load %arg18[%c2_228, %c8_229] : memref<18x144xf32, #tpu.memory_space<vmem>>, vector<16x128xf32>
    %c0_230 = arith.constant 0 : index
    %c896_231 = arith.constant 896 : index
    %142 = vector.load %arg19[%c0_230, %c896_231] : memref<64x1152xf32, #tpu.memory_space<vmem>>, vector<16x128xf32>
    tpu.vector_store %arg19[%c0_230, %c896_231], %141 {strides = array<i32>} : memref<64x1152xf32, #tpu.memory_space<vmem>>, vector<16x128xf32>,
    %c2_232 = arith.constant 2 : index
    %c16_233 = arith.constant 16 : index
    %143 = vector.load %arg18[%c2_232, %c16_233] : memref<18x144xf32, #tpu.memory_space<vmem>>, vector<16x128xf32>
    %c0_234 = arith.constant 0 : index
    %c1024_235 = arith.constant 1024 : index
    %144 = vector.load %arg19[%c0_234, %c1024_235] : memref<64x1152xf32, #tpu.memory_space<vmem>>, vector<16x128xf32>
    tpu.vector_store %arg19[%c0_234, %c1024_235], %143 {strides = array<i32>} : memref<64x1152xf32, #tpu.memory_space<vmem>>, vector<16x128xf32>,
    %c0_236 = arith.constant 0 : index
    %c0_237 = arith.constant 0 : index
    %145 = vector.load %arg19[%c0_236, %c0_237] : memref<64x1152xf32, #tpu.memory_space<vmem>>, vector<16x1152xf32>
    %c0_238 = arith.constant 0 : index
    %c0_239 = arith.constant 0 : index
    %146 = vector.load %arg7[%c0_238, %c0_239] : memref<1152x128xf32, #tpu.memory_space<vmem>>, vector<1152x128xf32>
    %cst_240 = arith.constant dense<0.000000e+00> : vector<16x128xf32>
    %147 = tpu.matmul %145, %146, %cst_240 {dimension_numbers = #tpu.dot_dimension_numbers<[1], [0], [0], [1], [0, 0, 1, 1], [], []>} : vector<16x1152xf32>, vector<1152x128xf32>, vector<16x128xf32> -> vector<16x128xf32>
    %c0_241 = arith.constant 0 : index
    %c0_242 = arith.constant 0 : index
    %148 = vector.load %arg8[%c0_241, %c0_242] : memref<1x128xf32, #tpu.memory_space<vmem>>, vector<1x128xf32>
    %149 = vector.broadcast %148 : vector<1x128xf32> to vector<16x128xf32>
    %150 = arith.addf %147, %149 : vector<16x128xf32>
    %c0_243 = arith.constant 0 : index
    %c0_244 = arith.constant 0 : index
    %151 = vector.load %arg20[%c0_243, %c0_244] : memref<64x128xf32, #tpu.memory_space<vmem>>, vector<16x128xf32>
    %c1_245 = arith.constant 1 : index
    %c8_246 = arith.constant 8 : index
    %152 = vector.load %arg18[%c1_245, %c8_246] : memref<18x144xf32, #tpu.memory_space<vmem>>, vector<16x128xf32>
    tpu.vector_store %arg18[%c1_245, %c8_246], %151 {strides = array<i32>} : memref<18x144xf32, #tpu.memory_space<vmem>>, vector<16x128xf32>,
    %c0_247 = arith.constant 0 : index
    %c0_248 = arith.constant 0 : index
    %153 = vector.load %arg18[%c0_247, %c0_248] : memref<18x144xf32, #tpu.memory_space<vmem>>, vector<16x128xf32>
    %c0_249 = arith.constant 0 : index
    %c0_250 = arith.constant 0 : index
    %154 = vector.load %arg19[%c0_249, %c0_250] : memref<64x1152xf32, #tpu.memory_space<vmem>>, vector<16x128xf32>
    tpu.vector_store %arg19[%c0_249, %c0_250], %153 {strides = array<i32>} : memref<64x1152xf32, #tpu.memory_space<vmem>>, vector<16x128xf32>,
    %c0_251 = arith.constant 0 : index
    %c8_252 = arith.constant 8 : index
    %155 = vector.load %arg18[%c0_251, %c8_252] : memref<18x144xf32, #tpu.memory_space<vmem>>, vector<16x128xf32>
    %c0_253 = arith.constant 0 : index
    %c128_254 = arith.constant 128 : index
    %156 = vector.load %arg19[%c0_253, %c128_254] : memref<64x1152xf32, #tpu.memory_space<vmem>>, vector<16x128xf32>
    tpu.vector_store %arg19[%c0_253, %c128_254], %155 {strides = array<i32>} : memref<64x1152xf32, #tpu.memory_space<vmem>>, vector<16x128xf32>,
    %c0_255 = arith.constant 0 : index
    %c16_256 = arith.constant 16 : index
    %157 = vector.load %arg18[%c0_255, %c16_256] : memref<18x144xf32, #tpu.memory_space<vmem>>, vector<16x128xf32>
    %c0_257 = arith.constant 0 : index
    %c256_258 = arith.constant 256 : index
    %158 = vector.load %arg19[%c0_257, %c256_258] : memref<64x1152xf32, #tpu.memory_space<vmem>>, vector<16x128xf32>
    tpu.vector_store %arg19[%c0_257, %c256_258], %157 {strides = array<i32>} : memref<64x1152xf32, #tpu.memory_space<vmem>>, vector<16x128xf32>,
    %c1_259 = arith.constant 1 : index
    %c0_260 = arith.constant 0 : index
    %159 = vector.load %arg18[%c1_259, %c0_260] : memref<18x144xf32, #tpu.memory_space<vmem>>, vector<16x128xf32>
    %c0_261 = arith.constant 0 : index
    %c384_262 = arith.constant 384 : index
    %160 = vector.load %arg19[%c0_261, %c384_262] : memref<64x1152xf32, #tpu.memory_space<vmem>>, vector<16x128xf32>
    tpu.vector_store %arg19[%c0_261, %c384_262], %159 {strides = array<i32>} : memref<64x1152xf32, #tpu.memory_space<vmem>>, vector<16x128xf32>,
    %c1_263 = arith.constant 1 : index
    %c8_264 = arith.constant 8 : index
    %161 = vector.load %arg18[%c1_263, %c8_264] : memref<18x144xf32, #tpu.memory_space<vmem>>, vector<16x128xf32>
    %c0_265 = arith.constant 0 : index
    %c512_266 = arith.constant 512 : index
    %162 = vector.load %arg19[%c0_265, %c512_266] : memref<64x1152xf32, #tpu.memory_space<vmem>>, vector<16x128xf32>
    tpu.vector_store %arg19[%c0_265, %c512_266], %161 {strides = array<i32>} : memref<64x1152xf32, #tpu.memory_space<vmem>>, vector<16x128xf32>,
    %c1_267 = arith.constant 1 : index
    %c16_268 = arith.constant 16 : index
    %163 = vector.load %arg18[%c1_267, %c16_268] : memref<18x144xf32, #tpu.memory_space<vmem>>, vector<16x128xf32>
    %c0_269 = arith.constant 0 : index
    %c640_270 = arith.constant 640 : index
    %164 = vector.load %arg19[%c0_269, %c640_270] : memref<64x1152xf32, #tpu.memory_space<vmem>>, vector<16x128xf32>
    tpu.vector_store %arg19[%c0_269, %c640_270], %163 {strides = array<i32>} : memref<64x1152xf32, #tpu.memory_space<vmem>>, vector<16x128xf32>,
    %c2_271 = arith.constant 2 : index
    %c0_272 = arith.constant 0 : index
    %165 = vector.load %arg18[%c2_271, %c0_272] : memref<18x144xf32, #tpu.memory_space<vmem>>, vector<16x128xf32>
    %c0_273 = arith.constant 0 : index
    %c768_274 = arith.constant 768 : index
    %166 = vector.load %arg19[%c0_273, %c768_274] : memref<64x1152xf32, #tpu.memory_space<vmem>>, vector<16x128xf32>
    tpu.vector_store %arg19[%c0_273, %c768_274], %165 {strides = array<i32>} : memref<64x1152xf32, #tpu.memory_space<vmem>>, vector<16x128xf32>,
    %c2_275 = arith.constant 2 : index
    %c8_276 = arith.constant 8 : index
    %167 = vector.load %arg18[%c2_275, %c8_276] : memref<18x144xf32, #tpu.memory_space<vmem>>, vector<16x128xf32>
    %c0_277 = arith.constant 0 : index
    %c896_278 = arith.constant 896 : index
    %168 = vector.load %arg19[%c0_277, %c896_278] : memref<64x1152xf32, #tpu.memory_space<vmem>>, vector<16x128xf32>
    tpu.vector_store %arg19[%c0_277, %c896_278], %167 {strides = array<i32>} : memref<64x1152xf32, #tpu.memory_space<vmem>>, vector<16x128xf32>,
    %c2_279 = arith.constant 2 : index
    %c16_280 = arith.constant 16 : index
    %169 = vector.load %arg18[%c2_279, %c16_280] : memref<18x144xf32, #tpu.memory_space<vmem>>, vector<16x128xf32>
    %c0_281 = arith.constant 0 : index
    %c1024_282 = arith.constant 1024 : index
    %170 = vector.load %arg19[%c0_281, %c1024_282] : memref<64x1152xf32, #tpu.memory_space<vmem>>, vector<16x128xf32>
    tpu.vector_store %arg19[%c0_281, %c1024_282], %169 {strides = array<i32>} : memref<64x1152xf32, #tpu.memory_space<vmem>>, vector<16x128xf32>,
    %c16_283 = arith.constant 16 : index
    %c0_284 = arith.constant 0 : index
    %171 = vector.load %arg20[%c16_283, %c0_284] : memref<64x128xf32, #tpu.memory_space<vmem>>, vector<16x128xf32>
    %c1_285 = arith.constant 1 : index
    %c8_286 = arith.constant 8 : index
    %172 = vector.load %arg18[%c1_285, %c8_286] : memref<18x144xf32, #tpu.memory_space<vmem>>, vector<16x128xf32>
    tpu.vector_store %arg18[%c1_285, %c8_286], %171 {strides = array<i32>} : memref<18x144xf32, #tpu.memory_space<vmem>>, vector<16x128xf32>,
    %c0_287 = arith.constant 0 : index
    %c0_288 = arith.constant 0 : index
    %173 = vector.load %arg18[%c0_287, %c0_288] : memref<18x144xf32, #tpu.memory_space<vmem>>, vector<16x128xf32>
    %c16_289 = arith.constant 16 : index
    %c0_290 = arith.constant 0 : index
    %174 = vector.load %arg19[%c16_289, %c0_290] : memref<64x1152xf32, #tpu.memory_space<vmem>>, vector<16x128xf32>
    tpu.vector_store %arg19[%c16_289, %c0_290], %173 {strides = array<i32>} : memref<64x1152xf32, #tpu.memory_space<vmem>>, vector<16x128xf32>,
    %c0_291 = arith.constant 0 : index
    %c8_292 = arith.constant 8 : index
    %175 = vector.load %arg18[%c0_291, %c8_292] : memref<18x144xf32, #tpu.memory_space<vmem>>, vector<16x128xf32>
    %c16_293 = arith.constant 16 : index
    %c128_294 = arith.constant 128 : index
    %176 = vector.load %arg19[%c16_293, %c128_294] : memref<64x1152xf32, #tpu.memory_space<vmem>>, vector<16x128xf32>
    tpu.vector_store %arg19[%c16_293, %c128_294], %175 {strides = array<i32>} : memref<64x1152xf32, #tpu.memory_space<vmem>>, vector<16x128xf32>,
    %c0_295 = arith.constant 0 : index
    %c16_296 = arith.constant 16 : index
    %177 = vector.load %arg18[%c0_295, %c16_296] : memref<18x144xf32, #tpu.memory_space<vmem>>, vector<16x128xf32>
    %c16_297 = arith.constant 16 : index
    %c256_298 = arith.constant 256 : index
    %178 = vector.load %arg19[%c16_297, %c256_298] : memref<64x1152xf32, #tpu.memory_space<vmem>>, vector<16x128xf32>
    tpu.vector_store %arg19[%c16_297, %c256_298], %177 {strides = array<i32>} : memref<64x1152xf32, #tpu.memory_space<vmem>>, vector<16x128xf32>,
    %c1_299 = arith.constant 1 : index
    %c0_300 = arith.constant 0 : index
    %179 = vector.load %arg18[%c1_299, %c0_300] : memref<18x144xf32, #tpu.memory_space<vmem>>, vector<16x128xf32>
    %c16_301 = arith.constant 16 : index
    %c384_302 = arith.constant 384 : index
    %180 = vector.load %arg19[%c16_301, %c384_302] : memref<64x1152xf32, #tpu.memory_space<vmem>>, vector<16x128xf32>
    tpu.vector_store %arg19[%c16_301, %c384_302], %179 {strides = array<i32>} : memref<64x1152xf32, #tpu.memory_space<vmem>>, vector<16x128xf32>,
    %c1_303 = arith.constant 1 : index
    %c8_304 = arith.constant 8 : index
    %181 = vector.load %arg18[%c1_303, %c8_304] : memref<18x144xf32, #tpu.memory_space<vmem>>, vector<16x128xf32>
    %c16_305 = arith.constant 16 : index
    %c512_306 = arith.constant 512 : index
    %182 = vector.load %arg19[%c16_305, %c512_306] : memref<64x1152xf32, #tpu.memory_space<vmem>>, vector<16x128xf32>
    tpu.vector_store %arg19[%c16_305, %c512_306], %181 {strides = array<i32>} : memref<64x1152xf32, #tpu.memory_space<vmem>>, vector<16x128xf32>,
    %c1_307 = arith.constant 1 : index
    %c16_308 = arith.constant 16 : index
    %183 = vector.load %arg18[%c1_307, %c16_308] : memref<18x144xf32, #tpu.memory_space<vmem>>, vector<16x128xf32>
    %c16_309 = arith.constant 16 : index
    %c640_310 = arith.constant 640 : index
    %184 = vector.load %arg19[%c16_309, %c640_310] : memref<64x1152xf32, #tpu.memory_space<vmem>>, vector<16x128xf32>
    tpu.vector_store %arg19[%c16_309, %c640_310], %183 {strides = array<i32>} : memref<64x1152xf32, #tpu.memory_space<vmem>>, vector<16x128xf32>,
    %c2_311 = arith.constant 2 : index
    %c0_312 = arith.constant 0 : index
    %185 = vector.load %arg18[%c2_311, %c0_312] : memref<18x144xf32, #tpu.memory_space<vmem>>, vector<16x128xf32>
    %c16_313 = arith.constant 16 : index
    %c768_314 = arith.constant 768 : index
    %186 = vector.load %arg19[%c16_313, %c768_314] : memref<64x1152xf32, #tpu.memory_space<vmem>>, vector<16x128xf32>
    tpu.vector_store %arg19[%c16_313, %c768_314], %185 {strides = array<i32>} : memref<64x1152xf32, #tpu.memory_space<vmem>>, vector<16x128xf32>,
    %c2_315 = arith.constant 2 : index
    %c8_316 = arith.constant 8 : index
    %187 = vector.load %arg18[%c2_315, %c8_316] : memref<18x144xf32, #tpu.memory_space<vmem>>, vector<16x128xf32>
    %c16_317 = arith.constant 16 : index
    %c896_318 = arith.constant 896 : index
    %188 = vector.load %arg19[%c16_317, %c896_318] : memref<64x1152xf32, #tpu.memory_space<vmem>>, vector<16x128xf32>
    tpu.vector_store %arg19[%c16_317, %c896_318], %187 {strides = array<i32>} : memref<64x1152xf32, #tpu.memory_space<vmem>>, vector<16x128xf32>,
    %c2_319 = arith.constant 2 : index
    %c16_320 = arith.constant 16 : index
    %189 = vector.load %arg18[%c2_319, %c16_320] : memref<18x144xf32, #tpu.memory_space<vmem>>, vector<16x128xf32>
    %c16_321 = arith.constant 16 : index
    %c1024_322 = arith.constant 1024 : index
    %190 = vector.load %arg19[%c16_321, %c1024_322] : memref<64x1152xf32, #tpu.memory_space<vmem>>, vector<16x128xf32>
    tpu.vector_store %arg19[%c16_321, %c1024_322], %189 {strides = array<i32>} : memref<64x1152xf32, #tpu.memory_space<vmem>>, vector<16x128xf32>,
    %c32_323 = arith.constant 32 : index
    %c0_324 = arith.constant 0 : index
    %191 = vector.load %arg20[%c32_323, %c0_324] : memref<64x128xf32, #tpu.memory_space<vmem>>, vector<16x128xf32>
    %c1_325 = arith.constant 1 : index
    %c8_326 = arith.constant 8 : index
    %192 = vector.load %arg18[%c1_325, %c8_326] : memref<18x144xf32, #tpu.memory_space<vmem>>, vector<16x128xf32>
    tpu.vector_store %arg18[%c1_325, %c8_326], %191 {strides = array<i32>} : memref<18x144xf32, #tpu.memory_space<vmem>>, vector<16x128xf32>,
    %c0_327 = arith.constant 0 : index
    %c0_328 = arith.constant 0 : index
    %193 = vector.load %arg18[%c0_327, %c0_328] : memref<18x144xf32, #tpu.memory_space<vmem>>, vector<16x128xf32>
    %c32_329 = arith.constant 32 : index
    %c0_330 = arith.constant 0 : index
    %194 = vector.load %arg19[%c32_329, %c0_330] : memref<64x1152xf32, #tpu.memory_space<vmem>>, vector<16x128xf32>
    tpu.vector_store %arg19[%c32_329, %c0_330], %193 {strides = array<i32>} : memref<64x1152xf32, #tpu.memory_space<vmem>>, vector<16x128xf32>,
    %c0_331 = arith.constant 0 : index
    %c8_332 = arith.constant 8 : index
    %195 = vector.load %arg18[%c0_331, %c8_332] : memref<18x144xf32, #tpu.memory_space<vmem>>, vector<16x128xf32>
    %c32_333 = arith.constant 32 : index
    %c128_334 = arith.constant 128 : index
    %196 = vector.load %arg19[%c32_333, %c128_334] : memref<64x1152xf32, #tpu.memory_space<vmem>>, vector<16x128xf32>
    tpu.vector_store %arg19[%c32_333, %c128_334], %195 {strides = array<i32>} : memref<64x1152xf32, #tpu.memory_space<vmem>>, vector<16x128xf32>,
    %c0_335 = arith.constant 0 : index
    %c16_336 = arith.constant 16 : index
    %197 = vector.load %arg18[%c0_335, %c16_336] : memref<18x144xf32, #tpu.memory_space<vmem>>, vector<16x128xf32>
    %c32_337 = arith.constant 32 : index
    %c256_338 = arith.constant 256 : index
    %198 = vector.load %arg19[%c32_337, %c256_338] : memref<64x1152xf32, #tpu.memory_space<vmem>>, vector<16x128xf32>
    tpu.vector_store %arg19[%c32_337, %c256_338], %197 {strides = array<i32>} : memref<64x1152xf32, #tpu.memory_space<vmem>>, vector<16x128xf32>,
    %c1_339 = arith.constant 1 : index
    %c0_340 = arith.constant 0 : index
    %199 = vector.load %arg18[%c1_339, %c0_340] : memref<18x144xf32, #tpu.memory_space<vmem>>, vector<16x128xf32>
    %c32_341 = arith.constant 32 : index
    %c384_342 = arith.constant 384 : index
    %200 = vector.load %arg19[%c32_341, %c384_342] : memref<64x1152xf32, #tpu.memory_space<vmem>>, vector<16x128xf32>
    tpu.vector_store %arg19[%c32_341, %c384_342], %199 {strides = array<i32>} : memref<64x1152xf32, #tpu.memory_space<vmem>>, vector<16x128xf32>,
    %c1_343 = arith.constant 1 : index
    %c8_344 = arith.constant 8 : index
    %201 = vector.load %arg18[%c1_343, %c8_344] : memref<18x144xf32, #tpu.memory_space<vmem>>, vector<16x128xf32>
    %c32_345 = arith.constant 32 : index
    %c512_346 = arith.constant 512 : index
    %202 = vector.load %arg19[%c32_345, %c512_346] : memref<64x1152xf32, #tpu.memory_space<vmem>>, vector<16x128xf32>
    tpu.vector_store %arg19[%c32_345, %c512_346], %201 {strides = array<i32>} : memref<64x1152xf32, #tpu.memory_space<vmem>>, vector<16x128xf32>,
    %c1_347 = arith.constant 1 : index
    %c16_348 = arith.constant 16 : index
    %203 = vector.load %arg18[%c1_347, %c16_348] : memref<18x144xf32, #tpu.memory_space<vmem>>, vector<16x128xf32>
    %c32_349 = arith.constant 32 : index
    %c640_350 = arith.constant 640 : index
    %204 = vector.load %arg19[%c32_349, %c640_350] : memref<64x1152xf32, #tpu.memory_space<vmem>>, vector<16x128xf32>
    tpu.vector_store %arg19[%c32_349, %c640_350], %203 {strides = array<i32>} : memref<64x1152xf32, #tpu.memory_space<vmem>>, vector<16x128xf32>,
    %c2_351 = arith.constant 2 : index
    %c0_352 = arith.constant 0 : index
    %205 = vector.load %arg18[%c2_351, %c0_352] : memref<18x144xf32, #tpu.memory_space<vmem>>, vector<16x128xf32>
    %c32_353 = arith.constant 32 : index
    %c768_354 = arith.constant 768 : index
    %206 = vector.load %arg19[%c32_353, %c768_354] : memref<64x1152xf32, #tpu.memory_space<vmem>>, vector<16x128xf32>
    tpu.vector_store %arg19[%c32_353, %c768_354], %205 {strides = array<i32>} : memref<64x1152xf32, #tpu.memory_space<vmem>>, vector<16x128xf32>,
    %c2_355 = arith.constant 2 : index
    %c8_356 = arith.constant 8 : index
    %207 = vector.load %arg18[%c2_355, %c8_356] : memref<18x144xf32, #tpu.memory_space<vmem>>, vector<16x128xf32>
    %c32_357 = arith.constant 32 : index
    %c896_358 = arith.constant 896 : index
    %208 = vector.load %arg19[%c32_357, %c896_358] : memref<64x1152xf32, #tpu.memory_space<vmem>>, vector<16x128xf32>
    tpu.vector_store %arg19[%c32_357, %c896_358], %207 {strides = array<i32>} : memref<64x1152xf32, #tpu.memory_space<vmem>>, vector<16x128xf32>,
    %c2_359 = arith.constant 2 : index
    %c16_360 = arith.constant 16 : index
    %209 = vector.load %arg18[%c2_359, %c16_360] : memref<18x144xf32, #tpu.memory_space<vmem>>, vector<16x128xf32>
    %c32_361 = arith.constant 32 : index
    %c1024_362 = arith.constant 1024 : index
    %210 = vector.load %arg19[%c32_361, %c1024_362] : memref<64x1152xf32, #tpu.memory_space<vmem>>, vector<16x128xf32>
    tpu.vector_store %arg19[%c32_361, %c1024_362], %209 {strides = array<i32>} : memref<64x1152xf32, #tpu.memory_space<vmem>>, vector<16x128xf32>,
    %c48_363 = arith.constant 48 : index
    %c0_364 = arith.constant 0 : index
    %211 = vector.load %arg20[%c48_363, %c0_364] : memref<64x128xf32, #tpu.memory_space<vmem>>, vector<16x128xf32>
    %c1_365 = arith.constant 1 : index
    %c8_366 = arith.constant 8 : index
    %212 = vector.load %arg18[%c1_365, %c8_366] : memref<18x144xf32, #tpu.memory_space<vmem>>, vector<16x128xf32>
    tpu.vector_store %arg18[%c1_365, %c8_366], %211 {strides = array<i32>} : memref<18x144xf32, #tpu.memory_space<vmem>>, vector<16x128xf32>,
    %c0_367 = arith.constant 0 : index
    %c0_368 = arith.constant 0 : index
    %213 = vector.load %arg18[%c0_367, %c0_368] : memref<18x144xf32, #tpu.memory_space<vmem>>, vector<16x128xf32>
    %c48_369 = arith.constant 48 : index
    %c0_370 = arith.constant 0 : index
    %214 = vector.load %arg19[%c48_369, %c0_370] : memref<64x1152xf32, #tpu.memory_space<vmem>>, vector<16x128xf32>
    tpu.vector_store %arg19[%c48_369, %c0_370], %213 {strides = array<i32>} : memref<64x1152xf32, #tpu.memory_space<vmem>>, vector<16x128xf32>,
    %c0_371 = arith.constant 0 : index
    %c8_372 = arith.constant 8 : index
    %215 = vector.load %arg18[%c0_371, %c8_372] : memref<18x144xf32, #tpu.memory_space<vmem>>, vector<16x128xf32>
    %c48_373 = arith.constant 48 : index
    %c128_374 = arith.constant 128 : index
    %216 = vector.load %arg19[%c48_373, %c128_374] : memref<64x1152xf32, #tpu.memory_space<vmem>>, vector<16x128xf32>
    tpu.vector_store %arg19[%c48_373, %c128_374], %215 {strides = array<i32>} : memref<64x1152xf32, #tpu.memory_space<vmem>>, vector<16x128xf32>,
    %c0_375 = arith.constant 0 : index
    %c16_376 = arith.constant 16 : index
    %217 = vector.load %arg18[%c0_375, %c16_376] : memref<18x144xf32, #tpu.memory_space<vmem>>, vector<16x128xf32>
    %c48_377 = arith.constant 48 : index
    %c256_378 = arith.constant 256 : index
    %218 = vector.load %arg19[%c48_377, %c256_378] : memref<64x1152xf32, #tpu.memory_space<vmem>>, vector<16x128xf32>
    tpu.vector_store %arg19[%c48_377, %c256_378], %217 {strides = array<i32>} : memref<64x1152xf32, #tpu.memory_space<vmem>>, vector<16x128xf32>,
    %c1_379 = arith.constant 1 : index
    %c0_380 = arith.constant 0 : index
    %219 = vector.load %arg18[%c1_379, %c0_380] : memref<18x144xf32, #tpu.memory_space<vmem>>, vector<16x128xf32>
    %c48_381 = arith.constant 48 : index
    %c384_382 = arith.constant 384 : index
    %220 = vector.load %arg19[%c48_381, %c384_382] : memref<64x1152xf32, #tpu.memory_space<vmem>>, vector<16x128xf32>
    tpu.vector_store %arg19[%c48_381, %c384_382], %219 {strides = array<i32>} : memref<64x1152xf32, #tpu.memory_space<vmem>>, vector<16x128xf32>,
    %c1_383 = arith.constant 1 : index
    %c8_384 = arith.constant 8 : index
    %221 = vector.load %arg18[%c1_383, %c8_384] : memref<18x144xf32, #tpu.memory_space<vmem>>, vector<16x128xf32>
    %c48_385 = arith.constant 48 : index
    %c512_386 = arith.constant 512 : index
    %222 = vector.load %arg19[%c48_385, %c512_386] : memref<64x1152xf32, #tpu.memory_space<vmem>>, vector<16x128xf32>
    tpu.vector_store %arg19[%c48_385, %c512_386], %221 {strides = array<i32>} : memref<64x1152xf32, #tpu.memory_space<vmem>>, vector<16x128xf32>,
    %c1_387 = arith.constant 1 : index
    %c16_388 = arith.constant 16 : index
    %223 = vector.load %arg18[%c1_387, %c16_388] : memref<18x144xf32, #tpu.memory_space<vmem>>, vector<16x128xf32>
    %c48_389 = arith.constant 48 : index
    %c640_390 = arith.constant 640 : index
    %224 = vector.load %arg19[%c48_389, %c640_390] : memref<64x1152xf32, #tpu.memory_space<vmem>>, vector<16x128xf32>
    tpu.vector_store %arg19[%c48_389, %c640_390], %223 {strides = array<i32>} : memref<64x1152xf32, #tpu.memory_space<vmem>>, vector<16x128xf32>,
    %c2_391 = arith.constant 2 : index
    %c0_392 = arith.constant 0 : index
    %225 = vector.load %arg18[%c2_391, %c0_392] : memref<18x144xf32, #tpu.memory_space<vmem>>, vector<16x128xf32>
    %c48_393 = arith.constant 48 : index
    %c768_394 = arith.constant 768 : index
    %226 = vector.load %arg19[%c48_393, %c768_394] : memref<64x1152xf32, #tpu.memory_space<vmem>>, vector<16x128xf32>
    tpu.vector_store %arg19[%c48_393, %c768_394], %225 {strides = array<i32>} : memref<64x1152xf32, #tpu.memory_space<vmem>>, vector<16x128xf32>,
    %c2_395 = arith.constant 2 : index
    %c8_396 = arith.constant 8 : index
    %227 = vector.load %arg18[%c2_395, %c8_396] : memref<18x144xf32, #tpu.memory_space<vmem>>, vector<16x128xf32>
    %c48_397 = arith.constant 48 : index
    %c896_398 = arith.constant 896 : index
    %228 = vector.load %arg19[%c48_397, %c896_398] : memref<64x1152xf32, #tpu.memory_space<vmem>>, vector<16x128xf32>
    tpu.vector_store %arg19[%c48_397, %c896_398], %227 {strides = array<i32>} : memref<64x1152xf32, #tpu.memory_space<vmem>>, vector<16x128xf32>,
    %c2_399 = arith.constant 2 : index
    %c16_400 = arith.constant 16 : index
    %229 = vector.load %arg18[%c2_399, %c16_400] : memref<18x144xf32, #tpu.memory_space<vmem>>, vector<16x128xf32>
    %c48_401 = arith.constant 48 : index
    %c1024_402 = arith.constant 1024 : index
    %230 = vector.load %arg19[%c48_401, %c1024_402] : memref<64x1152xf32, #tpu.memory_space<vmem>>, vector<16x128xf32>
    tpu.vector_store %arg19[%c48_401, %c1024_402], %229 {strides = array<i32>} : memref<64x1152xf32, #tpu.memory_space<vmem>>, vector<16x128xf32>,
    %c0_403 = arith.constant 0 : index
    %c0_404 = arith.constant 0 : index
    %231 = vector.load %arg19[%c0_403, %c0_404] : memref<64x1152xf32, #tpu.memory_space<vmem>>, vector<64x1152xf32>
    %c0_405 = arith.constant 0 : index
    %c0_406 = arith.constant 0 : index
    %232 = vector.load %arg6[%c0_405, %c0_406] : memref<1152x128xf32, #tpu.memory_space<vmem>>, vector<1152x128xf32>
    %cst_407 = arith.constant dense<0.000000e+00> : vector<64x128xf32>
    %233 = tpu.matmul %231, %232, %cst_407 {dimension_numbers = #tpu.dot_dimension_numbers<[1], [0], [0], [1], [0, 0, 1, 1], [], []>} : vector<64x1152xf32>, vector<1152x128xf32>, vector<64x128xf32> -> vector<64x128xf32>
    %234 = vector.shape_cast %233 : vector<64x128xf32> to vector<4x16x128xf32>
    %235 = vector.shape_cast %150 : vector<16x128xf32> to vector<1x16x128xf32>
    %236 = vector.broadcast %235 : vector<1x16x128xf32> to vector<4x16x128xf32>
    %237 = arith.addf %234, %236 : vector<4x16x128xf32>
    %cst_408 = arith.constant 0.000000e+00 : f32
    %238 = vector.broadcast %cst_408 : f32 to vector<4x16x128xf32>
    %239 = arith.cmpf oge, %237, %238 : vector<4x16x128xf32>
    %cst_409 = arith.constant 1.000000e-01 : f32
    %240 = vector.broadcast %cst_409 : f32 to vector<4x16x128xf32>
    %241 = arith.mulf %240, %237 : vector<4x16x128xf32>
    %242 = arith.select %239, %237, %241 : vector<4x16x128xi1>, vector<4x16x128xf32>
    %243 = vector.extract_strided_slice %242 {offsets = [0, 0, 0], sizes = [1, 16, 128], strides = [1, 1, 1]} : vector<4x16x128xf32> to vector<1x16x128xf32>
    %244 = vector.shape_cast %243 : vector<1x16x128xf32> to vector<16x128xf32>
    %c1_410 = arith.constant 1 : index
    %c8_411 = arith.constant 8 : index
    %245 = vector.load %arg18[%c1_410, %c8_411] : memref<18x144xf32, #tpu.memory_space<vmem>>, vector<16x128xf32>
    tpu.vector_store %arg18[%c1_410, %c8_411], %244 {strides = array<i32>} : memref<18x144xf32, #tpu.memory_space<vmem>>, vector<16x128xf32>,
    %c0_412 = arith.constant 0 : index
    %c0_413 = arith.constant 0 : index
    %246 = vector.load %arg18[%c0_412, %c0_413] : memref<18x144xf32, #tpu.memory_space<vmem>>, vector<16x128xf32>
    %c0_414 = arith.constant 0 : index
    %c0_415 = arith.constant 0 : index
    %247 = vector.load %arg19[%c0_414, %c0_415] : memref<64x1152xf32, #tpu.memory_space<vmem>>, vector<16x128xf32>
    tpu.vector_store %arg19[%c0_414, %c0_415], %246 {strides = array<i32>} : memref<64x1152xf32, #tpu.memory_space<vmem>>, vector<16x128xf32>,
    %c0_416 = arith.constant 0 : index
    %c8_417 = arith.constant 8 : index
    %248 = vector.load %arg18[%c0_416, %c8_417] : memref<18x144xf32, #tpu.memory_space<vmem>>, vector<16x128xf32>
    %c0_418 = arith.constant 0 : index
    %c128_419 = arith.constant 128 : index
    %249 = vector.load %arg19[%c0_418, %c128_419] : memref<64x1152xf32, #tpu.memory_space<vmem>>, vector<16x128xf32>
    tpu.vector_store %arg19[%c0_418, %c128_419], %248 {strides = array<i32>} : memref<64x1152xf32, #tpu.memory_space<vmem>>, vector<16x128xf32>,
    %c0_420 = arith.constant 0 : index
    %c16_421 = arith.constant 16 : index
    %250 = vector.load %arg18[%c0_420, %c16_421] : memref<18x144xf32, #tpu.memory_space<vmem>>, vector<16x128xf32>
    %c0_422 = arith.constant 0 : index
    %c256_423 = arith.constant 256 : index
    %251 = vector.load %arg19[%c0_422, %c256_423] : memref<64x1152xf32, #tpu.memory_space<vmem>>, vector<16x128xf32>
    tpu.vector_store %arg19[%c0_422, %c256_423], %250 {strides = array<i32>} : memref<64x1152xf32, #tpu.memory_space<vmem>>, vector<16x128xf32>,
    %c1_424 = arith.constant 1 : index
    %c0_425 = arith.constant 0 : index
    %252 = vector.load %arg18[%c1_424, %c0_425] : memref<18x144xf32, #tpu.memory_space<vmem>>, vector<16x128xf32>
    %c0_426 = arith.constant 0 : index
    %c384_427 = arith.constant 384 : index
    %253 = vector.load %arg19[%c0_426, %c384_427] : memref<64x1152xf32, #tpu.memory_space<vmem>>, vector<16x128xf32>
    tpu.vector_store %arg19[%c0_426, %c384_427], %252 {strides = array<i32>} : memref<64x1152xf32, #tpu.memory_space<vmem>>, vector<16x128xf32>,
    %c1_428 = arith.constant 1 : index
    %c8_429 = arith.constant 8 : index
    %254 = vector.load %arg18[%c1_428, %c8_429] : memref<18x144xf32, #tpu.memory_space<vmem>>, vector<16x128xf32>
    %c0_430 = arith.constant 0 : index
    %c512_431 = arith.constant 512 : index
    %255 = vector.load %arg19[%c0_430, %c512_431] : memref<64x1152xf32, #tpu.memory_space<vmem>>, vector<16x128xf32>
    tpu.vector_store %arg19[%c0_430, %c512_431], %254 {strides = array<i32>} : memref<64x1152xf32, #tpu.memory_space<vmem>>, vector<16x128xf32>,
    %c1_432 = arith.constant 1 : index
    %c16_433 = arith.constant 16 : index
    %256 = vector.load %arg18[%c1_432, %c16_433] : memref<18x144xf32, #tpu.memory_space<vmem>>, vector<16x128xf32>
    %c0_434 = arith.constant 0 : index
    %c640_435 = arith.constant 640 : index
    %257 = vector.load %arg19[%c0_434, %c640_435] : memref<64x1152xf32, #tpu.memory_space<vmem>>, vector<16x128xf32>
    tpu.vector_store %arg19[%c0_434, %c640_435], %256 {strides = array<i32>} : memref<64x1152xf32, #tpu.memory_space<vmem>>, vector<16x128xf32>,
    %c2_436 = arith.constant 2 : index
    %c0_437 = arith.constant 0 : index
    %258 = vector.load %arg18[%c2_436, %c0_437] : memref<18x144xf32, #tpu.memory_space<vmem>>, vector<16x128xf32>
    %c0_438 = arith.constant 0 : index
    %c768_439 = arith.constant 768 : index
    %259 = vector.load %arg19[%c0_438, %c768_439] : memref<64x1152xf32, #tpu.memory_space<vmem>>, vector<16x128xf32>
    tpu.vector_store %arg19[%c0_438, %c768_439], %258 {strides = array<i32>} : memref<64x1152xf32, #tpu.memory_space<vmem>>, vector<16x128xf32>,
    %c2_440 = arith.constant 2 : index
    %c8_441 = arith.constant 8 : index
    %260 = vector.load %arg18[%c2_440, %c8_441] : memref<18x144xf32, #tpu.memory_space<vmem>>, vector<16x128xf32>
    %c0_442 = arith.constant 0 : index
    %c896_443 = arith.constant 896 : index
    %261 = vector.load %arg19[%c0_442, %c896_443] : memref<64x1152xf32, #tpu.memory_space<vmem>>, vector<16x128xf32>
    tpu.vector_store %arg19[%c0_442, %c896_443], %260 {strides = array<i32>} : memref<64x1152xf32, #tpu.memory_space<vmem>>, vector<16x128xf32>,
    %c2_444 = arith.constant 2 : index
    %c16_445 = arith.constant 16 : index
    %262 = vector.load %arg18[%c2_444, %c16_445] : memref<18x144xf32, #tpu.memory_space<vmem>>, vector<16x128xf32>
    %c0_446 = arith.constant 0 : index
    %c1024_447 = arith.constant 1024 : index
    %263 = vector.load %arg19[%c0_446, %c1024_447] : memref<64x1152xf32, #tpu.memory_space<vmem>>, vector<16x128xf32>
    tpu.vector_store %arg19[%c0_446, %c1024_447], %262 {strides = array<i32>} : memref<64x1152xf32, #tpu.memory_space<vmem>>, vector<16x128xf32>,
    %264 = vector.extract_strided_slice %242 {offsets = [1, 0, 0], sizes = [1, 16, 128], strides = [1, 1, 1]} : vector<4x16x128xf32> to vector<1x16x128xf32>
    %265 = vector.shape_cast %264 : vector<1x16x128xf32> to vector<16x128xf32>
    %c1_448 = arith.constant 1 : index
    %c8_449 = arith.constant 8 : index
    %266 = vector.load %arg18[%c1_448, %c8_449] : memref<18x144xf32, #tpu.memory_space<vmem>>, vector<16x128xf32>
    tpu.vector_store %arg18[%c1_448, %c8_449], %265 {strides = array<i32>} : memref<18x144xf32, #tpu.memory_space<vmem>>, vector<16x128xf32>,
    %c0_450 = arith.constant 0 : index
    %c0_451 = arith.constant 0 : index
    %267 = vector.load %arg18[%c0_450, %c0_451] : memref<18x144xf32, #tpu.memory_space<vmem>>, vector<16x128xf32>
    %c16_452 = arith.constant 16 : index
    %c0_453 = arith.constant 0 : index
    %268 = vector.load %arg19[%c16_452, %c0_453] : memref<64x1152xf32, #tpu.memory_space<vmem>>, vector<16x128xf32>
    tpu.vector_store %arg19[%c16_452, %c0_453], %267 {strides = array<i32>} : memref<64x1152xf32, #tpu.memory_space<vmem>>, vector<16x128xf32>,
    %c0_454 = arith.constant 0 : index
    %c8_455 = arith.constant 8 : index
    %269 = vector.load %arg18[%c0_454, %c8_455] : memref<18x144xf32, #tpu.memory_space<vmem>>, vector<16x128xf32>
    %c16_456 = arith.constant 16 : index
    %c128_457 = arith.constant 128 : index
    %270 = vector.load %arg19[%c16_456, %c128_457] : memref<64x1152xf32, #tpu.memory_space<vmem>>, vector<16x128xf32>
    tpu.vector_store %arg19[%c16_456, %c128_457], %269 {strides = array<i32>} : memref<64x1152xf32, #tpu.memory_space<vmem>>, vector<16x128xf32>,
    %c0_458 = arith.constant 0 : index
    %c16_459 = arith.constant 16 : index
    %271 = vector.load %arg18[%c0_458, %c16_459] : memref<18x144xf32, #tpu.memory_space<vmem>>, vector<16x128xf32>
    %c16_460 = arith.constant 16 : index
    %c256_461 = arith.constant 256 : index
    %272 = vector.load %arg19[%c16_460, %c256_461] : memref<64x1152xf32, #tpu.memory_space<vmem>>, vector<16x128xf32>
    tpu.vector_store %arg19[%c16_460, %c256_461], %271 {strides = array<i32>} : memref<64x1152xf32, #tpu.memory_space<vmem>>, vector<16x128xf32>,
    %c1_462 = arith.constant 1 : index
    %c0_463 = arith.constant 0 : index
    %273 = vector.load %arg18[%c1_462, %c0_463] : memref<18x144xf32, #tpu.memory_space<vmem>>, vector<16x128xf32>
    %c16_464 = arith.constant 16 : index
    %c384_465 = arith.constant 384 : index
    %274 = vector.load %arg19[%c16_464, %c384_465] : memref<64x1152xf32, #tpu.memory_space<vmem>>, vector<16x128xf32>
    tpu.vector_store %arg19[%c16_464, %c384_465], %273 {strides = array<i32>} : memref<64x1152xf32, #tpu.memory_space<vmem>>, vector<16x128xf32>,
    %c1_466 = arith.constant 1 : index
    %c8_467 = arith.constant 8 : index
    %275 = vector.load %arg18[%c1_466, %c8_467] : memref<18x144xf32, #tpu.memory_space<vmem>>, vector<16x128xf32>
    %c16_468 = arith.constant 16 : index
    %c512_469 = arith.constant 512 : index
    %276 = vector.load %arg19[%c16_468, %c512_469] : memref<64x1152xf32, #tpu.memory_space<vmem>>, vector<16x128xf32>
    tpu.vector_store %arg19[%c16_468, %c512_469], %275 {strides = array<i32>} : memref<64x1152xf32, #tpu.memory_space<vmem>>, vector<16x128xf32>,
    %c1_470 = arith.constant 1 : index
    %c16_471 = arith.constant 16 : index
    %277 = vector.load %arg18[%c1_470, %c16_471] : memref<18x144xf32, #tpu.memory_space<vmem>>, vector<16x128xf32>
    %c16_472 = arith.constant 16 : index
    %c640_473 = arith.constant 640 : index
    %278 = vector.load %arg19[%c16_472, %c640_473] : memref<64x1152xf32, #tpu.memory_space<vmem>>, vector<16x128xf32>
    tpu.vector_store %arg19[%c16_472, %c640_473], %277 {strides = array<i32>} : memref<64x1152xf32, #tpu.memory_space<vmem>>, vector<16x128xf32>,
    %c2_474 = arith.constant 2 : index
    %c0_475 = arith.constant 0 : index
    %279 = vector.load %arg18[%c2_474, %c0_475] : memref<18x144xf32, #tpu.memory_space<vmem>>, vector<16x128xf32>
    %c16_476 = arith.constant 16 : index
    %c768_477 = arith.constant 768 : index
    %280 = vector.load %arg19[%c16_476, %c768_477] : memref<64x1152xf32, #tpu.memory_space<vmem>>, vector<16x128xf32>
    tpu.vector_store %arg19[%c16_476, %c768_477], %279 {strides = array<i32>} : memref<64x1152xf32, #tpu.memory_space<vmem>>, vector<16x128xf32>,
    %c2_478 = arith.constant 2 : index
    %c8_479 = arith.constant 8 : index
    %281 = vector.load %arg18[%c2_478, %c8_479] : memref<18x144xf32, #tpu.memory_space<vmem>>, vector<16x128xf32>
    %c16_480 = arith.constant 16 : index
    %c896_481 = arith.constant 896 : index
    %282 = vector.load %arg19[%c16_480, %c896_481] : memref<64x1152xf32, #tpu.memory_space<vmem>>, vector<16x128xf32>
    tpu.vector_store %arg19[%c16_480, %c896_481], %281 {strides = array<i32>} : memref<64x1152xf32, #tpu.memory_space<vmem>>, vector<16x128xf32>,
    %c2_482 = arith.constant 2 : index
    %c16_483 = arith.constant 16 : index
    %283 = vector.load %arg18[%c2_482, %c16_483] : memref<18x144xf32, #tpu.memory_space<vmem>>, vector<16x128xf32>
    %c16_484 = arith.constant 16 : index
    %c1024_485 = arith.constant 1024 : index
    %284 = vector.load %arg19[%c16_484, %c1024_485] : memref<64x1152xf32, #tpu.memory_space<vmem>>, vector<16x128xf32>
    tpu.vector_store %arg19[%c16_484, %c1024_485], %283 {strides = array<i32>} : memref<64x1152xf32, #tpu.memory_space<vmem>>, vector<16x128xf32>,
    %285 = vector.extract_strided_slice %242 {offsets = [2, 0, 0], sizes = [1, 16, 128], strides = [1, 1, 1]} : vector<4x16x128xf32> to vector<1x16x128xf32>
    %286 = vector.shape_cast %285 : vector<1x16x128xf32> to vector<16x128xf32>
    %c1_486 = arith.constant 1 : index
    %c8_487 = arith.constant 8 : index
    %287 = vector.load %arg18[%c1_486, %c8_487] : memref<18x144xf32, #tpu.memory_space<vmem>>, vector<16x128xf32>
    tpu.vector_store %arg18[%c1_486, %c8_487], %286 {strides = array<i32>} : memref<18x144xf32, #tpu.memory_space<vmem>>, vector<16x128xf32>,
    %c0_488 = arith.constant 0 : index
    %c0_489 = arith.constant 0 : index
    %288 = vector.load %arg18[%c0_488, %c0_489] : memref<18x144xf32, #tpu.memory_space<vmem>>, vector<16x128xf32>
    %c32_490 = arith.constant 32 : index
    %c0_491 = arith.constant 0 : index
    %289 = vector.load %arg19[%c32_490, %c0_491] : memref<64x1152xf32, #tpu.memory_space<vmem>>, vector<16x128xf32>
    tpu.vector_store %arg19[%c32_490, %c0_491], %288 {strides = array<i32>} : memref<64x1152xf32, #tpu.memory_space<vmem>>, vector<16x128xf32>,
    %c0_492 = arith.constant 0 : index
    %c8_493 = arith.constant 8 : index
    %290 = vector.load %arg18[%c0_492, %c8_493] : memref<18x144xf32, #tpu.memory_space<vmem>>, vector<16x128xf32>
    %c32_494 = arith.constant 32 : index
    %c128_495 = arith.constant 128 : index
    %291 = vector.load %arg19[%c32_494, %c128_495] : memref<64x1152xf32, #tpu.memory_space<vmem>>, vector<16x128xf32>
    tpu.vector_store %arg19[%c32_494, %c128_495], %290 {strides = array<i32>} : memref<64x1152xf32, #tpu.memory_space<vmem>>, vector<16x128xf32>,
    %c0_496 = arith.constant 0 : index
    %c16_497 = arith.constant 16 : index
    %292 = vector.load %arg18[%c0_496, %c16_497] : memref<18x144xf32, #tpu.memory_space<vmem>>, vector<16x128xf32>
    %c32_498 = arith.constant 32 : index
    %c256_499 = arith.constant 256 : index
    %293 = vector.load %arg19[%c32_498, %c256_499] : memref<64x1152xf32, #tpu.memory_space<vmem>>, vector<16x128xf32>
    tpu.vector_store %arg19[%c32_498, %c256_499], %292 {strides = array<i32>} : memref<64x1152xf32, #tpu.memory_space<vmem>>, vector<16x128xf32>,
    %c1_500 = arith.constant 1 : index
    %c0_501 = arith.constant 0 : index
    %294 = vector.load %arg18[%c1_500, %c0_501] : memref<18x144xf32, #tpu.memory_space<vmem>>, vector<16x128xf32>
    %c32_502 = arith.constant 32 : index
    %c384_503 = arith.constant 384 : index
    %295 = vector.load %arg19[%c32_502, %c384_503] : memref<64x1152xf32, #tpu.memory_space<vmem>>, vector<16x128xf32>
    tpu.vector_store %arg19[%c32_502, %c384_503], %294 {strides = array<i32>} : memref<64x1152xf32, #tpu.memory_space<vmem>>, vector<16x128xf32>,
    %c1_504 = arith.constant 1 : index
    %c8_505 = arith.constant 8 : index
    %296 = vector.load %arg18[%c1_504, %c8_505] : memref<18x144xf32, #tpu.memory_space<vmem>>, vector<16x128xf32>
    %c32_506 = arith.constant 32 : index
    %c512_507 = arith.constant 512 : index
    %297 = vector.load %arg19[%c32_506, %c512_507] : memref<64x1152xf32, #tpu.memory_space<vmem>>, vector<16x128xf32>
    tpu.vector_store %arg19[%c32_506, %c512_507], %296 {strides = array<i32>} : memref<64x1152xf32, #tpu.memory_space<vmem>>, vector<16x128xf32>,
    %c1_508 = arith.constant 1 : index
    %c16_509 = arith.constant 16 : index
    %298 = vector.load %arg18[%c1_508, %c16_509] : memref<18x144xf32, #tpu.memory_space<vmem>>, vector<16x128xf32>
    %c32_510 = arith.constant 32 : index
    %c640_511 = arith.constant 640 : index
    %299 = vector.load %arg19[%c32_510, %c640_511] : memref<64x1152xf32, #tpu.memory_space<vmem>>, vector<16x128xf32>
    tpu.vector_store %arg19[%c32_510, %c640_511], %298 {strides = array<i32>} : memref<64x1152xf32, #tpu.memory_space<vmem>>, vector<16x128xf32>,
    %c2_512 = arith.constant 2 : index
    %c0_513 = arith.constant 0 : index
    %300 = vector.load %arg18[%c2_512, %c0_513] : memref<18x144xf32, #tpu.memory_space<vmem>>, vector<16x128xf32>
    %c32_514 = arith.constant 32 : index
    %c768_515 = arith.constant 768 : index
    %301 = vector.load %arg19[%c32_514, %c768_515] : memref<64x1152xf32, #tpu.memory_space<vmem>>, vector<16x128xf32>
    tpu.vector_store %arg19[%c32_514, %c768_515], %300 {strides = array<i32>} : memref<64x1152xf32, #tpu.memory_space<vmem>>, vector<16x128xf32>,
    %c2_516 = arith.constant 2 : index
    %c8_517 = arith.constant 8 : index
    %302 = vector.load %arg18[%c2_516, %c8_517] : memref<18x144xf32, #tpu.memory_space<vmem>>, vector<16x128xf32>
    %c32_518 = arith.constant 32 : index
    %c896_519 = arith.constant 896 : index
    %303 = vector.load %arg19[%c32_518, %c896_519] : memref<64x1152xf32, #tpu.memory_space<vmem>>, vector<16x128xf32>
    tpu.vector_store %arg19[%c32_518, %c896_519], %302 {strides = array<i32>} : memref<64x1152xf32, #tpu.memory_space<vmem>>, vector<16x128xf32>,
    %c2_520 = arith.constant 2 : index
    %c16_521 = arith.constant 16 : index
    %304 = vector.load %arg18[%c2_520, %c16_521] : memref<18x144xf32, #tpu.memory_space<vmem>>, vector<16x128xf32>
    %c32_522 = arith.constant 32 : index
    %c1024_523 = arith.constant 1024 : index
    %305 = vector.load %arg19[%c32_522, %c1024_523] : memref<64x1152xf32, #tpu.memory_space<vmem>>, vector<16x128xf32>
    tpu.vector_store %arg19[%c32_522, %c1024_523], %304 {strides = array<i32>} : memref<64x1152xf32, #tpu.memory_space<vmem>>, vector<16x128xf32>,
    %306 = vector.extract_strided_slice %242 {offsets = [3, 0, 0], sizes = [1, 16, 128], strides = [1, 1, 1]} : vector<4x16x128xf32> to vector<1x16x128xf32>
    %307 = vector.shape_cast %306 : vector<1x16x128xf32> to vector<16x128xf32>
    %c1_524 = arith.constant 1 : index
    %c8_525 = arith.constant 8 : index
    %308 = vector.load %arg18[%c1_524, %c8_525] : memref<18x144xf32, #tpu.memory_space<vmem>>, vector<16x128xf32>
    tpu.vector_store %arg18[%c1_524, %c8_525], %307 {strides = array<i32>} : memref<18x144xf32, #tpu.memory_space<vmem>>, vector<16x128xf32>,
    %c0_526 = arith.constant 0 : index
    %c0_527 = arith.constant 0 : index
    %309 = vector.load %arg18[%c0_526, %c0_527] : memref<18x144xf32, #tpu.memory_space<vmem>>, vector<16x128xf32>
    %c48_528 = arith.constant 48 : index
    %c0_529 = arith.constant 0 : index
    %310 = vector.load %arg19[%c48_528, %c0_529] : memref<64x1152xf32, #tpu.memory_space<vmem>>, vector<16x128xf32>
    tpu.vector_store %arg19[%c48_528, %c0_529], %309 {strides = array<i32>} : memref<64x1152xf32, #tpu.memory_space<vmem>>, vector<16x128xf32>,
    %c0_530 = arith.constant 0 : index
    %c8_531 = arith.constant 8 : index
    %311 = vector.load %arg18[%c0_530, %c8_531] : memref<18x144xf32, #tpu.memory_space<vmem>>, vector<16x128xf32>
    %c48_532 = arith.constant 48 : index
    %c128_533 = arith.constant 128 : index
    %312 = vector.load %arg19[%c48_532, %c128_533] : memref<64x1152xf32, #tpu.memory_space<vmem>>, vector<16x128xf32>
    tpu.vector_store %arg19[%c48_532, %c128_533], %311 {strides = array<i32>} : memref<64x1152xf32, #tpu.memory_space<vmem>>, vector<16x128xf32>,
    %c0_534 = arith.constant 0 : index
    %c16_535 = arith.constant 16 : index
    %313 = vector.load %arg18[%c0_534, %c16_535] : memref<18x144xf32, #tpu.memory_space<vmem>>, vector<16x128xf32>
    %c48_536 = arith.constant 48 : index
    %c256_537 = arith.constant 256 : index
    %314 = vector.load %arg19[%c48_536, %c256_537] : memref<64x1152xf32, #tpu.memory_space<vmem>>, vector<16x128xf32>
    tpu.vector_store %arg19[%c48_536, %c256_537], %313 {strides = array<i32>} : memref<64x1152xf32, #tpu.memory_space<vmem>>, vector<16x128xf32>,
    %c1_538 = arith.constant 1 : index
    %c0_539 = arith.constant 0 : index
    %315 = vector.load %arg18[%c1_538, %c0_539] : memref<18x144xf32, #tpu.memory_space<vmem>>, vector<16x128xf32>
    %c48_540 = arith.constant 48 : index
    %c384_541 = arith.constant 384 : index
    %316 = vector.load %arg19[%c48_540, %c384_541] : memref<64x1152xf32, #tpu.memory_space<vmem>>, vector<16x128xf32>
    tpu.vector_store %arg19[%c48_540, %c384_541], %315 {strides = array<i32>} : memref<64x1152xf32, #tpu.memory_space<vmem>>, vector<16x128xf32>,
    %c1_542 = arith.constant 1 : index
    %c8_543 = arith.constant 8 : index
    %317 = vector.load %arg18[%c1_542, %c8_543] : memref<18x144xf32, #tpu.memory_space<vmem>>, vector<16x128xf32>
    %c48_544 = arith.constant 48 : index
    %c512_545 = arith.constant 512 : index
    %318 = vector.load %arg19[%c48_544, %c512_545] : memref<64x1152xf32, #tpu.memory_space<vmem>>, vector<16x128xf32>
    tpu.vector_store %arg19[%c48_544, %c512_545], %317 {strides = array<i32>} : memref<64x1152xf32, #tpu.memory_space<vmem>>, vector<16x128xf32>,
    %c1_546 = arith.constant 1 : index
    %c16_547 = arith.constant 16 : index
    %319 = vector.load %arg18[%c1_546, %c16_547] : memref<18x144xf32, #tpu.memory_space<vmem>>, vector<16x128xf32>
    %c48_548 = arith.constant 48 : index
    %c640_549 = arith.constant 640 : index
    %320 = vector.load %arg19[%c48_548, %c640_549] : memref<64x1152xf32, #tpu.memory_space<vmem>>, vector<16x128xf32>
    tpu.vector_store %arg19[%c48_548, %c640_549], %319 {strides = array<i32>} : memref<64x1152xf32, #tpu.memory_space<vmem>>, vector<16x128xf32>,
    %c2_550 = arith.constant 2 : index
    %c0_551 = arith.constant 0 : index
    %321 = vector.load %arg18[%c2_550, %c0_551] : memref<18x144xf32, #tpu.memory_space<vmem>>, vector<16x128xf32>
    %c48_552 = arith.constant 48 : index
    %c768_553 = arith.constant 768 : index
    %322 = vector.load %arg19[%c48_552, %c768_553] : memref<64x1152xf32, #tpu.memory_space<vmem>>, vector<16x128xf32>
    tpu.vector_store %arg19[%c48_552, %c768_553], %321 {strides = array<i32>} : memref<64x1152xf32, #tpu.memory_space<vmem>>, vector<16x128xf32>,
    %c2_554 = arith.constant 2 : index
    %c8_555 = arith.constant 8 : index
    %323 = vector.load %arg18[%c2_554, %c8_555] : memref<18x144xf32, #tpu.memory_space<vmem>>, vector<16x128xf32>
    %c48_556 = arith.constant 48 : index
    %c896_557 = arith.constant 896 : index
    %324 = vector.load %arg19[%c48_556, %c896_557] : memref<64x1152xf32, #tpu.memory_space<vmem>>, vector<16x128xf32>
    tpu.vector_store %arg19[%c48_556, %c896_557], %323 {strides = array<i32>} : memref<64x1152xf32, #tpu.memory_space<vmem>>, vector<16x128xf32>,
    %c2_558 = arith.constant 2 : index
    %c16_559 = arith.constant 16 : index
    %325 = vector.load %arg18[%c2_558, %c16_559] : memref<18x144xf32, #tpu.memory_space<vmem>>, vector<16x128xf32>
    %c48_560 = arith.constant 48 : index
    %c1024_561 = arith.constant 1024 : index
    %326 = vector.load %arg19[%c48_560, %c1024_561] : memref<64x1152xf32, #tpu.memory_space<vmem>>, vector<16x128xf32>
    tpu.vector_store %arg19[%c48_560, %c1024_561], %325 {strides = array<i32>} : memref<64x1152xf32, #tpu.memory_space<vmem>>, vector<16x128xf32>,
    %c0_562 = arith.constant 0 : index
    %c0_563 = arith.constant 0 : index
    %327 = vector.load %arg19[%c0_562, %c0_563] : memref<64x1152xf32, #tpu.memory_space<vmem>>, vector<64x1152xf32>
    %c0_564 = arith.constant 0 : index
    %c0_565 = arith.constant 0 : index
    %328 = vector.load %arg9[%c0_564, %c0_565] : memref<1152x128xf32, #tpu.memory_space<vmem>>, vector<1152x128xf32>
    %cst_566 = arith.constant dense<0.000000e+00> : vector<64x128xf32>
    %329 = tpu.matmul %327, %328, %cst_566 {dimension_numbers = #tpu.dot_dimension_numbers<[1], [0], [0], [1], [0, 0, 1, 1], [], []>} : vector<64x1152xf32>, vector<1152x128xf32>, vector<64x128xf32> -> vector<64x128xf32>
    %c0_567 = arith.constant 0 : index
    %c0_568 = arith.constant 0 : index
    %330 = vector.load %arg10[%c0_567, %c0_568] : memref<1x128xf32, #tpu.memory_space<vmem>>, vector<1x128xf32>
    %331 = vector.broadcast %330 : vector<1x128xf32> to vector<64x128xf32>
    %332 = arith.addf %329, %331 : vector<64x128xf32>
    %cst_569 = arith.constant 0.000000e+00 : f32
    %333 = vector.broadcast %cst_569 : f32 to vector<64x128xf32>
    %334 = arith.maximumf %332, %333 : vector<64x128xf32>
    %335 = vector.shape_cast %334 : vector<64x128xf32> to vector<4x16x128xf32>
    %336 = vector.extract_strided_slice %335 {offsets = [0, 0, 0], sizes = [1, 16, 128], strides = [1, 1, 1]} : vector<4x16x128xf32> to vector<1x16x128xf32>
    %337 = vector.shape_cast %336 : vector<1x16x128xf32> to vector<16x128xf32>
    %c1_570 = arith.constant 1 : index
    %c8_571 = arith.constant 8 : index
    %338 = vector.load %arg18[%c1_570, %c8_571] : memref<18x144xf32, #tpu.memory_space<vmem>>, vector<16x128xf32>
    tpu.vector_store %arg18[%c1_570, %c8_571], %337 {strides = array<i32>} : memref<18x144xf32, #tpu.memory_space<vmem>>, vector<16x128xf32>,
    %c0_572 = arith.constant 0 : index
    %c0_573 = arith.constant 0 : index
    %339 = vector.load %arg18[%c0_572, %c0_573] : memref<18x144xf32, #tpu.memory_space<vmem>>, vector<16x128xf32>
    %c0_574 = arith.constant 0 : index
    %c0_575 = arith.constant 0 : index
    %340 = vector.load %arg19[%c0_574, %c0_575] : memref<64x1152xf32, #tpu.memory_space<vmem>>, vector<16x128xf32>
    tpu.vector_store %arg19[%c0_574, %c0_575], %339 {strides = array<i32>} : memref<64x1152xf32, #tpu.memory_space<vmem>>, vector<16x128xf32>,
    %c0_576 = arith.constant 0 : index
    %c8_577 = arith.constant 8 : index
    %341 = vector.load %arg18[%c0_576, %c8_577] : memref<18x144xf32, #tpu.memory_space<vmem>>, vector<16x128xf32>
    %c0_578 = arith.constant 0 : index
    %c128_579 = arith.constant 128 : index
    %342 = vector.load %arg19[%c0_578, %c128_579] : memref<64x1152xf32, #tpu.memory_space<vmem>>, vector<16x128xf32>
    tpu.vector_store %arg19[%c0_578, %c128_579], %341 {strides = array<i32>} : memref<64x1152xf32, #tpu.memory_space<vmem>>, vector<16x128xf32>,
    %c0_580 = arith.constant 0 : index
    %c16_581 = arith.constant 16 : index
    %343 = vector.load %arg18[%c0_580, %c16_581] : memref<18x144xf32, #tpu.memory_space<vmem>>, vector<16x128xf32>
    %c0_582 = arith.constant 0 : index
    %c256_583 = arith.constant 256 : index
    %344 = vector.load %arg19[%c0_582, %c256_583] : memref<64x1152xf32, #tpu.memory_space<vmem>>, vector<16x128xf32>
    tpu.vector_store %arg19[%c0_582, %c256_583], %343 {strides = array<i32>} : memref<64x1152xf32, #tpu.memory_space<vmem>>, vector<16x128xf32>,
    %c1_584 = arith.constant 1 : index
    %c0_585 = arith.constant 0 : index
    %345 = vector.load %arg18[%c1_584, %c0_585] : memref<18x144xf32, #tpu.memory_space<vmem>>, vector<16x128xf32>
    %c0_586 = arith.constant 0 : index
    %c384_587 = arith.constant 384 : index
    %346 = vector.load %arg19[%c0_586, %c384_587] : memref<64x1152xf32, #tpu.memory_space<vmem>>, vector<16x128xf32>
    tpu.vector_store %arg19[%c0_586, %c384_587], %345 {strides = array<i32>} : memref<64x1152xf32, #tpu.memory_space<vmem>>, vector<16x128xf32>,
    %c1_588 = arith.constant 1 : index
    %c8_589 = arith.constant 8 : index
    %347 = vector.load %arg18[%c1_588, %c8_589] : memref<18x144xf32, #tpu.memory_space<vmem>>, vector<16x128xf32>
    %c0_590 = arith.constant 0 : index
    %c512_591 = arith.constant 512 : index
    %348 = vector.load %arg19[%c0_590, %c512_591] : memref<64x1152xf32, #tpu.memory_space<vmem>>, vector<16x128xf32>
    tpu.vector_store %arg19[%c0_590, %c512_591], %347 {strides = array<i32>} : memref<64x1152xf32, #tpu.memory_space<vmem>>, vector<16x128xf32>,
    %c1_592 = arith.constant 1 : index
    %c16_593 = arith.constant 16 : index
    %349 = vector.load %arg18[%c1_592, %c16_593] : memref<18x144xf32, #tpu.memory_space<vmem>>, vector<16x128xf32>
    %c0_594 = arith.constant 0 : index
    %c640_595 = arith.constant 640 : index
    %350 = vector.load %arg19[%c0_594, %c640_595] : memref<64x1152xf32, #tpu.memory_space<vmem>>, vector<16x128xf32>
    tpu.vector_store %arg19[%c0_594, %c640_595], %349 {strides = array<i32>} : memref<64x1152xf32, #tpu.memory_space<vmem>>, vector<16x128xf32>,
    %c2_596 = arith.constant 2 : index
    %c0_597 = arith.constant 0 : index
    %351 = vector.load %arg18[%c2_596, %c0_597] : memref<18x144xf32, #tpu.memory_space<vmem>>, vector<16x128xf32>
    %c0_598 = arith.constant 0 : index
    %c768_599 = arith.constant 768 : index
    %352 = vector.load %arg19[%c0_598, %c768_599] : memref<64x1152xf32, #tpu.memory_space<vmem>>, vector<16x128xf32>
    tpu.vector_store %arg19[%c0_598, %c768_599], %351 {strides = array<i32>} : memref<64x1152xf32, #tpu.memory_space<vmem>>, vector<16x128xf32>,
    %c2_600 = arith.constant 2 : index
    %c8_601 = arith.constant 8 : index
    %353 = vector.load %arg18[%c2_600, %c8_601] : memref<18x144xf32, #tpu.memory_space<vmem>>, vector<16x128xf32>
    %c0_602 = arith.constant 0 : index
    %c896_603 = arith.constant 896 : index
    %354 = vector.load %arg19[%c0_602, %c896_603] : memref<64x1152xf32, #tpu.memory_space<vmem>>, vector<16x128xf32>
    tpu.vector_store %arg19[%c0_602, %c896_603], %353 {strides = array<i32>} : memref<64x1152xf32, #tpu.memory_space<vmem>>, vector<16x128xf32>,
    %c2_604 = arith.constant 2 : index
    %c16_605 = arith.constant 16 : index
    %355 = vector.load %arg18[%c2_604, %c16_605] : memref<18x144xf32, #tpu.memory_space<vmem>>, vector<16x128xf32>
    %c0_606 = arith.constant 0 : index
    %c1024_607 = arith.constant 1024 : index
    %356 = vector.load %arg19[%c0_606, %c1024_607] : memref<64x1152xf32, #tpu.memory_space<vmem>>, vector<16x128xf32>
    tpu.vector_store %arg19[%c0_606, %c1024_607], %355 {strides = array<i32>} : memref<64x1152xf32, #tpu.memory_space<vmem>>, vector<16x128xf32>,
    %357 = vector.extract_strided_slice %335 {offsets = [1, 0, 0], sizes = [1, 16, 128], strides = [1, 1, 1]} : vector<4x16x128xf32> to vector<1x16x128xf32>
    %358 = vector.shape_cast %357 : vector<1x16x128xf32> to vector<16x128xf32>
    %c1_608 = arith.constant 1 : index
    %c8_609 = arith.constant 8 : index
    %359 = vector.load %arg18[%c1_608, %c8_609] : memref<18x144xf32, #tpu.memory_space<vmem>>, vector<16x128xf32>
    tpu.vector_store %arg18[%c1_608, %c8_609], %358 {strides = array<i32>} : memref<18x144xf32, #tpu.memory_space<vmem>>, vector<16x128xf32>,
    %c0_610 = arith.constant 0 : index
    %c0_611 = arith.constant 0 : index
    %360 = vector.load %arg18[%c0_610, %c0_611] : memref<18x144xf32, #tpu.memory_space<vmem>>, vector<16x128xf32>
    %c16_612 = arith.constant 16 : index
    %c0_613 = arith.constant 0 : index
    %361 = vector.load %arg19[%c16_612, %c0_613] : memref<64x1152xf32, #tpu.memory_space<vmem>>, vector<16x128xf32>
    tpu.vector_store %arg19[%c16_612, %c0_613], %360 {strides = array<i32>} : memref<64x1152xf32, #tpu.memory_space<vmem>>, vector<16x128xf32>,
    %c0_614 = arith.constant 0 : index
    %c8_615 = arith.constant 8 : index
    %362 = vector.load %arg18[%c0_614, %c8_615] : memref<18x144xf32, #tpu.memory_space<vmem>>, vector<16x128xf32>
    %c16_616 = arith.constant 16 : index
    %c128_617 = arith.constant 128 : index
    %363 = vector.load %arg19[%c16_616, %c128_617] : memref<64x1152xf32, #tpu.memory_space<vmem>>, vector<16x128xf32>
    tpu.vector_store %arg19[%c16_616, %c128_617], %362 {strides = array<i32>} : memref<64x1152xf32, #tpu.memory_space<vmem>>, vector<16x128xf32>,
    %c0_618 = arith.constant 0 : index
    %c16_619 = arith.constant 16 : index
    %364 = vector.load %arg18[%c0_618, %c16_619] : memref<18x144xf32, #tpu.memory_space<vmem>>, vector<16x128xf32>
    %c16_620 = arith.constant 16 : index
    %c256_621 = arith.constant 256 : index
    %365 = vector.load %arg19[%c16_620, %c256_621] : memref<64x1152xf32, #tpu.memory_space<vmem>>, vector<16x128xf32>
    tpu.vector_store %arg19[%c16_620, %c256_621], %364 {strides = array<i32>} : memref<64x1152xf32, #tpu.memory_space<vmem>>, vector<16x128xf32>,
    %c1_622 = arith.constant 1 : index
    %c0_623 = arith.constant 0 : index
    %366 = vector.load %arg18[%c1_622, %c0_623] : memref<18x144xf32, #tpu.memory_space<vmem>>, vector<16x128xf32>
    %c16_624 = arith.constant 16 : index
    %c384_625 = arith.constant 384 : index
    %367 = vector.load %arg19[%c16_624, %c384_625] : memref<64x1152xf32, #tpu.memory_space<vmem>>, vector<16x128xf32>
    tpu.vector_store %arg19[%c16_624, %c384_625], %366 {strides = array<i32>} : memref<64x1152xf32, #tpu.memory_space<vmem>>, vector<16x128xf32>,
    %c1_626 = arith.constant 1 : index
    %c8_627 = arith.constant 8 : index
    %368 = vector.load %arg18[%c1_626, %c8_627] : memref<18x144xf32, #tpu.memory_space<vmem>>, vector<16x128xf32>
    %c16_628 = arith.constant 16 : index
    %c512_629 = arith.constant 512 : index
    %369 = vector.load %arg19[%c16_628, %c512_629] : memref<64x1152xf32, #tpu.memory_space<vmem>>, vector<16x128xf32>
    tpu.vector_store %arg19[%c16_628, %c512_629], %368 {strides = array<i32>} : memref<64x1152xf32, #tpu.memory_space<vmem>>, vector<16x128xf32>,
    %c1_630 = arith.constant 1 : index
    %c16_631 = arith.constant 16 : index
    %370 = vector.load %arg18[%c1_630, %c16_631] : memref<18x144xf32, #tpu.memory_space<vmem>>, vector<16x128xf32>
    %c16_632 = arith.constant 16 : index
    %c640_633 = arith.constant 640 : index
    %371 = vector.load %arg19[%c16_632, %c640_633] : memref<64x1152xf32, #tpu.memory_space<vmem>>, vector<16x128xf32>
    tpu.vector_store %arg19[%c16_632, %c640_633], %370 {strides = array<i32>} : memref<64x1152xf32, #tpu.memory_space<vmem>>, vector<16x128xf32>,
    %c2_634 = arith.constant 2 : index
    %c0_635 = arith.constant 0 : index
    %372 = vector.load %arg18[%c2_634, %c0_635] : memref<18x144xf32, #tpu.memory_space<vmem>>, vector<16x128xf32>
    %c16_636 = arith.constant 16 : index
    %c768_637 = arith.constant 768 : index
    %373 = vector.load %arg19[%c16_636, %c768_637] : memref<64x1152xf32, #tpu.memory_space<vmem>>, vector<16x128xf32>
    tpu.vector_store %arg19[%c16_636, %c768_637], %372 {strides = array<i32>} : memref<64x1152xf32, #tpu.memory_space<vmem>>, vector<16x128xf32>,
    %c2_638 = arith.constant 2 : index
    %c8_639 = arith.constant 8 : index
    %374 = vector.load %arg18[%c2_638, %c8_639] : memref<18x144xf32, #tpu.memory_space<vmem>>, vector<16x128xf32>
    %c16_640 = arith.constant 16 : index
    %c896_641 = arith.constant 896 : index
    %375 = vector.load %arg19[%c16_640, %c896_641] : memref<64x1152xf32, #tpu.memory_space<vmem>>, vector<16x128xf32>
    tpu.vector_store %arg19[%c16_640, %c896_641], %374 {strides = array<i32>} : memref<64x1152xf32, #tpu.memory_space<vmem>>, vector<16x128xf32>,
    %c2_642 = arith.constant 2 : index
    %c16_643 = arith.constant 16 : index
    %376 = vector.load %arg18[%c2_642, %c16_643] : memref<18x144xf32, #tpu.memory_space<vmem>>, vector<16x128xf32>
    %c16_644 = arith.constant 16 : index
    %c1024_645 = arith.constant 1024 : index
    %377 = vector.load %arg19[%c16_644, %c1024_645] : memref<64x1152xf32, #tpu.memory_space<vmem>>, vector<16x128xf32>
    tpu.vector_store %arg19[%c16_644, %c1024_645], %376 {strides = array<i32>} : memref<64x1152xf32, #tpu.memory_space<vmem>>, vector<16x128xf32>,
    %378 = vector.extract_strided_slice %335 {offsets = [2, 0, 0], sizes = [1, 16, 128], strides = [1, 1, 1]} : vector<4x16x128xf32> to vector<1x16x128xf32>
    %379 = vector.shape_cast %378 : vector<1x16x128xf32> to vector<16x128xf32>
    %c1_646 = arith.constant 1 : index
    %c8_647 = arith.constant 8 : index
    %380 = vector.load %arg18[%c1_646, %c8_647] : memref<18x144xf32, #tpu.memory_space<vmem>>, vector<16x128xf32>
    tpu.vector_store %arg18[%c1_646, %c8_647], %379 {strides = array<i32>} : memref<18x144xf32, #tpu.memory_space<vmem>>, vector<16x128xf32>,
    %c0_648 = arith.constant 0 : index
    %c0_649 = arith.constant 0 : index
    %381 = vector.load %arg18[%c0_648, %c0_649] : memref<18x144xf32, #tpu.memory_space<vmem>>, vector<16x128xf32>
    %c32_650 = arith.constant 32 : index
    %c0_651 = arith.constant 0 : index
    %382 = vector.load %arg19[%c32_650, %c0_651] : memref<64x1152xf32, #tpu.memory_space<vmem>>, vector<16x128xf32>
    tpu.vector_store %arg19[%c32_650, %c0_651], %381 {strides = array<i32>} : memref<64x1152xf32, #tpu.memory_space<vmem>>, vector<16x128xf32>,
    %c0_652 = arith.constant 0 : index
    %c8_653 = arith.constant 8 : index
    %383 = vector.load %arg18[%c0_652, %c8_653] : memref<18x144xf32, #tpu.memory_space<vmem>>, vector<16x128xf32>
    %c32_654 = arith.constant 32 : index
    %c128_655 = arith.constant 128 : index
    %384 = vector.load %arg19[%c32_654, %c128_655] : memref<64x1152xf32, #tpu.memory_space<vmem>>, vector<16x128xf32>
    tpu.vector_store %arg19[%c32_654, %c128_655], %383 {strides = array<i32>} : memref<64x1152xf32, #tpu.memory_space<vmem>>, vector<16x128xf32>,
    %c0_656 = arith.constant 0 : index
    %c16_657 = arith.constant 16 : index
    %385 = vector.load %arg18[%c0_656, %c16_657] : memref<18x144xf32, #tpu.memory_space<vmem>>, vector<16x128xf32>
    %c32_658 = arith.constant 32 : index
    %c256_659 = arith.constant 256 : index
    %386 = vector.load %arg19[%c32_658, %c256_659] : memref<64x1152xf32, #tpu.memory_space<vmem>>, vector<16x128xf32>
    tpu.vector_store %arg19[%c32_658, %c256_659], %385 {strides = array<i32>} : memref<64x1152xf32, #tpu.memory_space<vmem>>, vector<16x128xf32>,
    %c1_660 = arith.constant 1 : index
    %c0_661 = arith.constant 0 : index
    %387 = vector.load %arg18[%c1_660, %c0_661] : memref<18x144xf32, #tpu.memory_space<vmem>>, vector<16x128xf32>
    %c32_662 = arith.constant 32 : index
    %c384_663 = arith.constant 384 : index
    %388 = vector.load %arg19[%c32_662, %c384_663] : memref<64x1152xf32, #tpu.memory_space<vmem>>, vector<16x128xf32>
    tpu.vector_store %arg19[%c32_662, %c384_663], %387 {strides = array<i32>} : memref<64x1152xf32, #tpu.memory_space<vmem>>, vector<16x128xf32>,
    %c1_664 = arith.constant 1 : index
    %c8_665 = arith.constant 8 : index
    %389 = vector.load %arg18[%c1_664, %c8_665] : memref<18x144xf32, #tpu.memory_space<vmem>>, vector<16x128xf32>
    %c32_666 = arith.constant 32 : index
    %c512_667 = arith.constant 512 : index
    %390 = vector.load %arg19[%c32_666, %c512_667] : memref<64x1152xf32, #tpu.memory_space<vmem>>, vector<16x128xf32>
    tpu.vector_store %arg19[%c32_666, %c512_667], %389 {strides = array<i32>} : memref<64x1152xf32, #tpu.memory_space<vmem>>, vector<16x128xf32>,
    %c1_668 = arith.constant 1 : index
    %c16_669 = arith.constant 16 : index
    %391 = vector.load %arg18[%c1_668, %c16_669] : memref<18x144xf32, #tpu.memory_space<vmem>>, vector<16x128xf32>
    %c32_670 = arith.constant 32 : index
    %c640_671 = arith.constant 640 : index
    %392 = vector.load %arg19[%c32_670, %c640_671] : memref<64x1152xf32, #tpu.memory_space<vmem>>, vector<16x128xf32>
    tpu.vector_store %arg19[%c32_670, %c640_671], %391 {strides = array<i32>} : memref<64x1152xf32, #tpu.memory_space<vmem>>, vector<16x128xf32>,
    %c2_672 = arith.constant 2 : index
    %c0_673 = arith.constant 0 : index
    %393 = vector.load %arg18[%c2_672, %c0_673] : memref<18x144xf32, #tpu.memory_space<vmem>>, vector<16x128xf32>
    %c32_674 = arith.constant 32 : index
    %c768_675 = arith.constant 768 : index
    %394 = vector.load %arg19[%c32_674, %c768_675] : memref<64x1152xf32, #tpu.memory_space<vmem>>, vector<16x128xf32>
    tpu.vector_store %arg19[%c32_674, %c768_675], %393 {strides = array<i32>} : memref<64x1152xf32, #tpu.memory_space<vmem>>, vector<16x128xf32>,
    %c2_676 = arith.constant 2 : index
    %c8_677 = arith.constant 8 : index
    %395 = vector.load %arg18[%c2_676, %c8_677] : memref<18x144xf32, #tpu.memory_space<vmem>>, vector<16x128xf32>
    %c32_678 = arith.constant 32 : index
    %c896_679 = arith.constant 896 : index
    %396 = vector.load %arg19[%c32_678, %c896_679] : memref<64x1152xf32, #tpu.memory_space<vmem>>, vector<16x128xf32>
    tpu.vector_store %arg19[%c32_678, %c896_679], %395 {strides = array<i32>} : memref<64x1152xf32, #tpu.memory_space<vmem>>, vector<16x128xf32>,
    %c2_680 = arith.constant 2 : index
    %c16_681 = arith.constant 16 : index
    %397 = vector.load %arg18[%c2_680, %c16_681] : memref<18x144xf32, #tpu.memory_space<vmem>>, vector<16x128xf32>
    %c32_682 = arith.constant 32 : index
    %c1024_683 = arith.constant 1024 : index
    %398 = vector.load %arg19[%c32_682, %c1024_683] : memref<64x1152xf32, #tpu.memory_space<vmem>>, vector<16x128xf32>
    tpu.vector_store %arg19[%c32_682, %c1024_683], %397 {strides = array<i32>} : memref<64x1152xf32, #tpu.memory_space<vmem>>, vector<16x128xf32>,
    %399 = vector.extract_strided_slice %335 {offsets = [3, 0, 0], sizes = [1, 16, 128], strides = [1, 1, 1]} : vector<4x16x128xf32> to vector<1x16x128xf32>
    %400 = vector.shape_cast %399 : vector<1x16x128xf32> to vector<16x128xf32>
    %c1_684 = arith.constant 1 : index
    %c8_685 = arith.constant 8 : index
    %401 = vector.load %arg18[%c1_684, %c8_685] : memref<18x144xf32, #tpu.memory_space<vmem>>, vector<16x128xf32>
    tpu.vector_store %arg18[%c1_684, %c8_685], %400 {strides = array<i32>} : memref<18x144xf32, #tpu.memory_space<vmem>>, vector<16x128xf32>,
    %c0_686 = arith.constant 0 : index
    %c0_687 = arith.constant 0 : index
    %402 = vector.load %arg18[%c0_686, %c0_687] : memref<18x144xf32, #tpu.memory_space<vmem>>, vector<16x128xf32>
    %c48_688 = arith.constant 48 : index
    %c0_689 = arith.constant 0 : index
    %403 = vector.load %arg19[%c48_688, %c0_689] : memref<64x1152xf32, #tpu.memory_space<vmem>>, vector<16x128xf32>
    tpu.vector_store %arg19[%c48_688, %c0_689], %402 {strides = array<i32>} : memref<64x1152xf32, #tpu.memory_space<vmem>>, vector<16x128xf32>,
    %c0_690 = arith.constant 0 : index
    %c8_691 = arith.constant 8 : index
    %404 = vector.load %arg18[%c0_690, %c8_691] : memref<18x144xf32, #tpu.memory_space<vmem>>, vector<16x128xf32>
    %c48_692 = arith.constant 48 : index
    %c128_693 = arith.constant 128 : index
    %405 = vector.load %arg19[%c48_692, %c128_693] : memref<64x1152xf32, #tpu.memory_space<vmem>>, vector<16x128xf32>
    tpu.vector_store %arg19[%c48_692, %c128_693], %404 {strides = array<i32>} : memref<64x1152xf32, #tpu.memory_space<vmem>>, vector<16x128xf32>,
    %c0_694 = arith.constant 0 : index
    %c16_695 = arith.constant 16 : index
    %406 = vector.load %arg18[%c0_694, %c16_695] : memref<18x144xf32, #tpu.memory_space<vmem>>, vector<16x128xf32>
    %c48_696 = arith.constant 48 : index
    %c256_697 = arith.constant 256 : index
    %407 = vector.load %arg19[%c48_696, %c256_697] : memref<64x1152xf32, #tpu.memory_space<vmem>>, vector<16x128xf32>
    tpu.vector_store %arg19[%c48_696, %c256_697], %406 {strides = array<i32>} : memref<64x1152xf32, #tpu.memory_space<vmem>>, vector<16x128xf32>,
    %c1_698 = arith.constant 1 : index
    %c0_699 = arith.constant 0 : index
    %408 = vector.load %arg18[%c1_698, %c0_699] : memref<18x144xf32, #tpu.memory_space<vmem>>, vector<16x128xf32>
    %c48_700 = arith.constant 48 : index
    %c384_701 = arith.constant 384 : index
    %409 = vector.load %arg19[%c48_700, %c384_701] : memref<64x1152xf32, #tpu.memory_space<vmem>>, vector<16x128xf32>
    tpu.vector_store %arg19[%c48_700, %c384_701], %408 {strides = array<i32>} : memref<64x1152xf32, #tpu.memory_space<vmem>>, vector<16x128xf32>,
    %c1_702 = arith.constant 1 : index
    %c8_703 = arith.constant 8 : index
    %410 = vector.load %arg18[%c1_702, %c8_703] : memref<18x144xf32, #tpu.memory_space<vmem>>, vector<16x128xf32>
    %c48_704 = arith.constant 48 : index
    %c512_705 = arith.constant 512 : index
    %411 = vector.load %arg19[%c48_704, %c512_705] : memref<64x1152xf32, #tpu.memory_space<vmem>>, vector<16x128xf32>
    tpu.vector_store %arg19[%c48_704, %c512_705], %410 {strides = array<i32>} : memref<64x1152xf32, #tpu.memory_space<vmem>>, vector<16x128xf32>,
    %c1_706 = arith.constant 1 : index
    %c16_707 = arith.constant 16 : index
    %412 = vector.load %arg18[%c1_706, %c16_707] : memref<18x144xf32, #tpu.memory_space<vmem>>, vector<16x128xf32>
    %c48_708 = arith.constant 48 : index
    %c640_709 = arith.constant 640 : index
    %413 = vector.load %arg19[%c48_708, %c640_709] : memref<64x1152xf32, #tpu.memory_space<vmem>>, vector<16x128xf32>
    tpu.vector_store %arg19[%c48_708, %c640_709], %412 {strides = array<i32>} : memref<64x1152xf32, #tpu.memory_space<vmem>>, vector<16x128xf32>,
    %c2_710 = arith.constant 2 : index
    %c0_711 = arith.constant 0 : index
    %414 = vector.load %arg18[%c2_710, %c0_711] : memref<18x144xf32, #tpu.memory_space<vmem>>, vector<16x128xf32>
    %c48_712 = arith.constant 48 : index
    %c768_713 = arith.constant 768 : index
    %415 = vector.load %arg19[%c48_712, %c768_713] : memref<64x1152xf32, #tpu.memory_space<vmem>>, vector<16x128xf32>
    tpu.vector_store %arg19[%c48_712, %c768_713], %414 {strides = array<i32>} : memref<64x1152xf32, #tpu.memory_space<vmem>>, vector<16x128xf32>,
    %c2_714 = arith.constant 2 : index
    %c8_715 = arith.constant 8 : index
    %416 = vector.load %arg18[%c2_714, %c8_715] : memref<18x144xf32, #tpu.memory_space<vmem>>, vector<16x128xf32>
    %c48_716 = arith.constant 48 : index
    %c896_717 = arith.constant 896 : index
    %417 = vector.load %arg19[%c48_716, %c896_717] : memref<64x1152xf32, #tpu.memory_space<vmem>>, vector<16x128xf32>
    tpu.vector_store %arg19[%c48_716, %c896_717], %416 {strides = array<i32>} : memref<64x1152xf32, #tpu.memory_space<vmem>>, vector<16x128xf32>,
    %c2_718 = arith.constant 2 : index
    %c16_719 = arith.constant 16 : index
    %418 = vector.load %arg18[%c2_718, %c16_719] : memref<18x144xf32, #tpu.memory_space<vmem>>, vector<16x128xf32>
    %c48_720 = arith.constant 48 : index
    %c1024_721 = arith.constant 1024 : index
    %419 = vector.load %arg19[%c48_720, %c1024_721] : memref<64x1152xf32, #tpu.memory_space<vmem>>, vector<16x128xf32>
    tpu.vector_store %arg19[%c48_720, %c1024_721], %418 {strides = array<i32>} : memref<64x1152xf32, #tpu.memory_space<vmem>>, vector<16x128xf32>,
    %c0_722 = arith.constant 0 : index
    %c0_723 = arith.constant 0 : index
    %420 = vector.load %arg19[%c0_722, %c0_723] : memref<64x1152xf32, #tpu.memory_space<vmem>>, vector<64x1152xf32>
    %c0_724 = arith.constant 0 : index
    %c0_725 = arith.constant 0 : index
    %421 = vector.load %arg11[%c0_724, %c0_725] : memref<1152x128xf32, #tpu.memory_space<vmem>>, vector<1152x128xf32>
    %cst_726 = arith.constant dense<0.000000e+00> : vector<64x128xf32>
    %422 = tpu.matmul %420, %421, %cst_726 {dimension_numbers = #tpu.dot_dimension_numbers<[1], [0], [0], [1], [0, 0, 1, 1], [], []>} : vector<64x1152xf32>, vector<1152x128xf32>, vector<64x128xf32> -> vector<64x128xf32>
    %c0_727 = arith.constant 0 : index
    %c0_728 = arith.constant 0 : index
    %423 = vector.load %arg12[%c0_727, %c0_728] : memref<1x128xf32, #tpu.memory_space<vmem>>, vector<1x128xf32>
    %424 = vector.broadcast %423 : vector<1x128xf32> to vector<64x128xf32>
    %425 = arith.addf %422, %424 : vector<64x128xf32>
    %426 = vector.shape_cast %425 : vector<64x128xf32> to vector<4x16x128xf32>
    %cst_729 = arith.constant dense<0.000000e+00> : vector<4x128xf32>
    %427 = vector.multi_reduction <add>, %426, %cst_729 [1] : vector<4x16x128xf32> to vector<4x128xf32>
    %cst_730 = arith.constant 1.600000e+01 : f32
    %428 = vector.broadcast %cst_730 : f32 to vector<4x128xf32>
    %429 = arith.divf %427, %428 : vector<4x128xf32>
    %430 = vector.shape_cast %429 : vector<4x128xf32> to vector<4x1x128xf32>
    %c0_731 = arith.constant 0 : index
    %c0_732 = arith.constant 0 : index
    %431 = vector.load %arg13[%c0_731, %c0_732] : memref<8x128xf32, #tpu.memory_space<vmem>>, vector<8x128xf32>
    %432 = vector.shape_cast %431 : vector<8x128xf32> to vector<1x8x128xf32>
    %433 = vector.broadcast %430 : vector<4x1x128xf32> to vector<4x8x128xf32>
    %434 = vector.broadcast %432 : vector<1x8x128xf32> to vector<4x8x128xf32>
    %435 = arith.mulf %433, %434 : vector<4x8x128xf32>
    %cst_733 = arith.constant dense<0.000000e+00> : vector<4x8xf32>
    %436 = vector.multi_reduction <add>, %435, %cst_733 [2] : vector<4x8x128xf32> to vector<4x8xf32>
    %c0_734 = arith.constant 0 : index
    %c0_735 = arith.constant 0 : index
    %437 = vector.load %arg14[%c0_734, %c0_735] : memref<1x8xf32, #tpu.memory_space<vmem>>, vector<1x8xf32>
    %438 = vector.broadcast %437 : vector<1x8xf32> to vector<4x8xf32>
    %439 = arith.addf %436, %438 : vector<4x8xf32>
    %cst_736 = arith.constant 0.000000e+00 : f32
    %440 = vector.broadcast %cst_736 : f32 to vector<4x8xf32>
    %441 = arith.maximumf %439, %440 : vector<4x8xf32>
    %442 = vector.shape_cast %441 : vector<4x8xf32> to vector<4x8x1xf32>
    %c0_737 = arith.constant 0 : index
    %c0_738 = arith.constant 0 : index
    %443 = vector.load %arg15[%c0_737, %c0_738] : memref<8x128xf32, #tpu.memory_space<vmem>>, vector<8x128xf32>
    %444 = vector.shape_cast %443 : vector<8x128xf32> to vector<1x8x128xf32>
    %445 = vector.broadcast %442 : vector<4x8x1xf32> to vector<4x8x128xf32>
    %446 = vector.broadcast %444 : vector<1x8x128xf32> to vector<4x8x128xf32>
    %447 = arith.mulf %445, %446 : vector<4x8x128xf32>
    %cst_739 = arith.constant dense<0.000000e+00> : vector<4x128xf32>
    %448 = vector.multi_reduction <add>, %447, %cst_739 [1] : vector<4x8x128xf32> to vector<4x128xf32>
    %c0_740 = arith.constant 0 : index
    %c0_741 = arith.constant 0 : index
    %449 = vector.load %arg16[%c0_740, %c0_741] : memref<1x128xf32, #tpu.memory_space<vmem>>, vector<1x128xf32>
    %450 = vector.broadcast %449 : vector<1x128xf32> to vector<4x128xf32>
    %451 = arith.addf %448, %450 : vector<4x128xf32>
    %cst_742 = arith.constant 0.000000e+00 : f32
    %452 = vector.broadcast %cst_742 : f32 to vector<4x128xf32>
    %453 = arith.subf %452, %451 : vector<4x128xf32>
    %454 = math.exp %453 : vector<4x128xf32>
    %cst_743 = arith.constant 1.000000e+00 : f32
    %455 = vector.broadcast %cst_743 : f32 to vector<4x128xf32>
    %456 = arith.addf %455, %454 : vector<4x128xf32>
    %cst_744 = arith.constant 1.000000e+00 : f32
    %457 = vector.broadcast %cst_744 : f32 to vector<4x128xf32>
    %458 = arith.divf %457, %456 : vector<4x128xf32>
    %459 = vector.shape_cast %458 : vector<4x128xf32> to vector<4x1x128xf32>
    %460 = vector.broadcast %459 : vector<4x1x128xf32> to vector<4x16x128xf32>
    %461 = arith.mulf %426, %460 : vector<4x16x128xf32>
    %462 = arith.addf %461, %242 : vector<4x16x128xf32>
    %c0_745 = arith.constant 0 : index
    %c0_746 = arith.constant 0 : index
    %c0_747 = arith.constant 0 : index
    %c0_748 = arith.constant 0 : index
    %463 = vector.load %arg1[%c0_745, %c0_746, %c0_747, %c0_748] : memref<1x4x16x128xf32, #tpu.memory_space<vmem>>, vector<1x4x16x128xf32>
    %464 = vector.shape_cast %463 : vector<1x4x16x128xf32> to vector<4x16x128xf32>
    %465 = arith.addf %462, %464 : vector<4x16x128xf32>
    %466 = vector.shape_cast %465 : vector<4x16x128xf32> to vector<1x4x16x128xf32>
    %c0_749 = arith.constant 0 : index
    %c0_750 = arith.constant 0 : index
    %c0_751 = arith.constant 0 : index
    %c0_752 = arith.constant 0 : index
    %467 = vector.load %arg17[%c0_749, %c0_750, %c0_751, %c0_752] : memref<1x4x16x128xf32, #tpu.memory_space<vmem>>, vector<1x4x16x128xf32>
    tpu.vector_store %arg17[%c0_749, %c0_750, %c0_751, %c0_752], %466 {strides = array<i32>} : memref<1x4x16x128xf32, #tpu.memory_space<vmem>>, vector<1x4x16x128xf32>,
    return
  }
  func.func @transform_0(%arg0: i32) -> (i32, i32, i32, i32) {
    %c0_i32 = arith.constant 0 : i32
    %c0_i32_0 = arith.constant 0 : i32
    %c0_i32_1 = arith.constant 0 : i32
    %c0_i32_2 = arith.constant 0 : i32
    return %arg0, %c0_i32, %c0_i32_0, %c0_i32_1 : i32, i32, i32, i32
  }
  func.func @transform_1(%arg0: i32) -> (i32, i32) {
    %c0_i32 = arith.constant 0 : i32
    %c0_i32_0 = arith.constant 0 : i32
    %c0_i32_1 = arith.constant 0 : i32
    return %c0_i32, %c0_i32_0 : i32, i32
  }
  func.func @transform_2(%arg0: i32) -> (i32, i32) {
    %c0_i32 = arith.constant 0 : i32
    %c0_i32_0 = arith.constant 0 : i32
    %c0_i32_1 = arith.constant 0 : i32
    return %c0_i32, %c0_i32_0 : i32, i32
  }
  func.func @transform_3(%arg0: i32) -> (i32, i32, i32) {
    %c0_i32 = arith.constant 0 : i32
    %c0_i32_0 = arith.constant 0 : i32
    %c0_i32_1 = arith.constant 0 : i32
    %c0_i32_2 = arith.constant 0 : i32
    return %c0_i32, %c0_i32_0, %c0_i32_1 : i32, i32, i32
  }
  func.func @transform_4(%arg0: i32) -> (i32, i32) {
    %c0_i32 = arith.constant 0 : i32
    %c0_i32_0 = arith.constant 0 : i32
    %c0_i32_1 = arith.constant 0 : i32
    return %c0_i32, %c0_i32_0 : i32, i32
  }
  func.func @transform_5(%arg0: i32) -> (i32, i32) {
    %c0_i32 = arith.constant 0 : i32
    %c0_i32_0 = arith.constant 0 : i32
    %c0_i32_1 = arith.constant 0 : i32
    return %c0_i32, %c0_i32_0 : i32, i32
  }
  func.func @transform_6(%arg0: i32) -> (i32, i32) {
    %c0_i32 = arith.constant 0 : i32
    %c0_i32_0 = arith.constant 0 : i32
    %c0_i32_1 = arith.constant 0 : i32
    return %c0_i32, %c0_i32_0 : i32, i32
  }
  func.func @transform_7(%arg0: i32) -> (i32, i32) {
    %c0_i32 = arith.constant 0 : i32
    %c0_i32_0 = arith.constant 0 : i32
    %c0_i32_1 = arith.constant 0 : i32
    return %c0_i32, %c0_i32_0 : i32, i32
  }
  func.func @transform_8(%arg0: i32) -> (i32, i32) {
    %c0_i32 = arith.constant 0 : i32
    %c0_i32_0 = arith.constant 0 : i32
    %c0_i32_1 = arith.constant 0 : i32
    return %c0_i32, %c0_i32_0 : i32, i32
  }
  func.func @transform_9(%arg0: i32) -> (i32, i32) {
    %c0_i32 = arith.constant 0 : i32
    %c0_i32_0 = arith.constant 0 : i32
    %c0_i32_1 = arith.constant 0 : i32
    return %c0_i32, %c0_i32_0 : i32, i32
  }
  func.func @transform_10(%arg0: i32) -> (i32, i32) {
    %c0_i32 = arith.constant 0 : i32
    %c0_i32_0 = arith.constant 0 : i32
    %c0_i32_1 = arith.constant 0 : i32
    return %c0_i32, %c0_i32_0 : i32, i32
  }
  func.func @transform_11(%arg0: i32) -> (i32, i32) {
    %c0_i32 = arith.constant 0 : i32
    %c0_i32_0 = arith.constant 0 : i32
    %c0_i32_1 = arith.constant 0 : i32
    return %c0_i32, %c0_i32_0 : i32, i32
  }
  func.func @transform_12(%arg0: i32) -> (i32, i32) {
    %c0_i32 = arith.constant 0 : i32
    %c0_i32_0 = arith.constant 0 : i32
    %c0_i32_1 = arith.constant 0 : i32
    return %c0_i32, %c0_i32_0 : i32, i32
  }
  func.func @transform_13(%arg0: i32) -> (i32, i32) {
    %c0_i32 = arith.constant 0 : i32
    %c0_i32_0 = arith.constant 0 : i32
    %c0_i32_1 = arith.constant 0 : i32
    return %c0_i32, %c0_i32_0 : i32, i32
  }
  func.func @transform_14(%arg0: i32) -> (i32, i32) {
    %c0_i32 = arith.constant 0 : i32
    %c0_i32_0 = arith.constant 0 : i32
    %c0_i32_1 = arith.constant 0 : i32
    return %c0_i32, %c0_i32_0 : i32, i32
  }
  func.func @transform_15(%arg0: i32) -> (i32, i32) {
    %c0_i32 = arith.constant 0 : i32
    %c0_i32_0 = arith.constant 0 : i32
    %c0_i32_1 = arith.constant 0 : i32
    return %c0_i32, %c0_i32_0 : i32, i32
  }
  func.func @transform_16(%arg0: i32) -> (i32, i32, i32, i32) {
    %c0_i32 = arith.constant 0 : i32
    %c0_i32_0 = arith.constant 0 : i32
    %c0_i32_1 = arith.constant 0 : i32
    %c0_i32_2 = arith.constant 0 : i32
    return %arg0, %c0_i32, %c0_i32_0, %c0_i32_1 : i32, i32, i32, i32
  }
}

</mosaic_0001>

<llo_original>
// kernel: tile.51
$region0: #{tile.51}
  #allocation0 [shape = 's32[1]{0}', space=sflag, size = 0x4, scoped, tag = 'scoped memory for tile.51']
  %s0 = inlined_call_operand.vmem [shape: f32[8], index: 0, kind: input, shape index: {}]
  %s1 = inlined_call_operand.vmem [shape: f32[16,8], index: 1, kind: output, shape index: {}]
  // Predicated region
  $region2: #{tile.51} parent=0 // pred_check
    _
  $region3: #{tile.51} parent=0 // pred_check_branch
    %3 = sbr.rel (0) target = $region5
  $region4: #{tile.51} parent=0 // pred_region
    _
  $region5: #{tile.51} parent=0 // pred_fallthru
    _
  %v4 = vld [vmem:[%s0] ss:$0 sm:$0xff]
  %5 = vst [vmem:[%s1] sm:$0xff] %v4
  %s6 = scalar_lea.vmem %s1, 8
  %7 = vst [vmem:[%s6] sm:$0xff] %v4

// kernel: tile.52
$region0: #{tile.52}
  %s0 = inlined_call_operand.vmem [shape: f32[16,8], index: 0, kind: input, shape index: {}]
  %s1 = inlined_call_operand.vmem [shape: f32[1,128], index: 1, kind: output, shape index: {}]
  $region1: #{tile.52} parent=0
    #allocation0 [shape = 'u8[4096]{0}', space=vmem, size = 0x1000, scoped, tag = 'scoped mem for output reshape']
    %v2 = vld [vmem:[%s0] sm:$0x1]
    %vm3 = vcmask 64512
    %4 = vst.msk [vmem:[#allocation0] sm:$0x1] %vm3, %v2
    %s5 = scalar_lea.vmem %s0, 15
    %v6 = vld [vmem:[%s5] sm:$0x1]
    %7 = vrot.lane.b32.xlu0 %v6, 120
    %v8 = vpop.permute.xlu0 %7
    %vm9 = vcmask 1048512
    %10 = vst.msk [vmem:[#allocation0] sm:$0x1] %vm9, %v8
    %s11 = scalar_lea.vmem %s0, 14
    %v12 = vld [vmem:[%s11] sm:$0x1]
    %13 = vrot.lane.b32.xlu0 %v12, 112
    %v14 = vpop.permute.xlu0 %13
    %vm15 = vcmask 982912
    %16 = vst.msk [vmem:[#allocation0] sm:$0x1] %vm15, %v14
    %s17 = scalar_lea.vmem %s0, 13
    %v18 = vld [vmem:[%s17] sm:$0x1]
    %19 = vrot.lane.b32.xlu0 %v18, 104
    %v20 = vpop.permute.xlu0 %19
    %vm21 = vcmask 917312
    %22 = vst.msk [vmem:[#allocation0] sm:$0x1] %vm21, %v20
    %s23 = scalar_lea.vmem %s0, 12
    %v24 = vld [vmem:[%s23] sm:$0x1]
    %25 = vrot.lane.b32.xlu0 %v24, 96
    %v26 = vpop.permute.xlu0 %25
    %vm27 = vcmask 851712
    %28 = vst.msk [vmem:[#allocation0] sm:$0x1] %vm27, %v26
    %s29 = scalar_lea.vmem %s0, 11
    %v30 = vld [vmem:[%s29] sm:$0x1]
    %31 = vrot.lane.b32.xlu0 %v30, 88
    %v32 = vpop.permute.xlu0 %31
    %vm33 = vcmask 786112
    %34 = vst.msk [vmem:[#allocation0] sm:$0x1] %vm33, %v32
    %s35 = scalar_lea.vmem %s0, 10
    %v36 = vld [vmem:[%s35] sm:$0x1]
    %37 = vrot.lane.b32.xlu0 %v36, 80
    %v38 = vpop.permute.xlu0 %37
    %vm39 = vcmask 720512
    %40 = vst.msk [vmem:[#allocation0] sm:$0x1] %vm39, %v38
    %s41 = scalar_lea.vmem %s0, 9
    %v42 = vld [vmem:[%s41] sm:$0x1]
    %43 = vrot.lane.b32.xlu0 %v42, 72
    %v44 = vpop.permute.xlu0 %43
    %vm45 = vcmask 654912
    %46 = vst.msk [vmem:[#allocation0] sm:$0x1] %vm45, %v44
    %s47 = scalar_lea.vmem %s0, 8
    %v48 = vld [vmem:[%s47] sm:$0x1]
    %49 = vrot.lane.b32.xlu0 %v48, 64
    %v50 = vpop.permute.xlu0 %49
    %vm51 = vcmask 589312
    %52 = vst.msk [vmem:[#allocation0] sm:$0x1] %vm51, %v50
    %s53 = scalar_lea.vmem %s0, 7
    %v54 = vld [vmem:[%s53] sm:$0x1]
    %55 = vrot.lane.b32.xlu0 %v54, 56
    %v56 = vpop.permute.xlu0 %55
    %vm57 = vcmask 523712
    %58 = vst.msk [vmem:[#allocation0] sm:$0x1] %vm57, %v56
    %s59 = scalar_lea.vmem %s0, 6
    %v60 = vld [vmem:[%s59] sm:$0x1]
    %61 = vrot.lane.b32.xlu0 %v60, 48
    %v62 = vpop.permute.xlu0 %61
    %vm63 = vcmask 458112
    %64 = vst.msk [vmem:[#allocation0] sm:$0x1] %vm63, %v62
    %s65 = scalar_lea.vmem %s0, 5
    %v66 = vld [vmem:[%s65] sm:$0x1]
    %67 = vrot.lane.b32.xlu0 %v66, 40
    %v68 = vpop.permute.xlu0 %67
    %vm69 = vcmask 392512
    %70 = vst.msk [vmem:[#allocation0] sm:$0x1] %vm69, %v68
    %s71 = scalar_lea.vmem %s0, 4
    %v72 = vld [vmem:[%s71] sm:$0x1]
    %73 = vrot.lane.b32.xlu0 %v72, 32
    %v74 = vpop.permute.xlu0 %73
    %vm75 = vcmask 326912
    %76 = vst.msk [vmem:[#allocation0] sm:$0x1] %vm75, %v74
    %s77 = scalar_lea.vmem %s0, 3
    %v78 = vld [vmem:[%s77] sm:$0x1]
    %79 = vrot.lane.b32.xlu0 %v78, 24
    %v80 = vpop.permute.xlu0 %79
    %vm81 = vcmask 261312
    %82 = vst.msk [vmem:[#allocation0] sm:$0x1] %vm81, %v80
    %s83 = scalar_lea.vmem %s0, 2
    %v84 = vld [vmem:[%s83] sm:$0x1]
    %85 = vrot.lane.b32.xlu0 %v84, 16
    %v86 = vpop.permute.xlu0 %85
    %vm87 = vcmask 195712
    %88 = vst.msk [vmem:[#allocation0] sm:$0x1] %vm87, %v86
    %s89 = scalar_lea.vmem %s0, 1
    %v90 = vld [vmem:[%s89] sm:$0x1]
    %91 = vrot.lane.b32.xlu0 %v90, 8
    %v92 = vpop.permute.xlu0 %91
    %vm93 = vcmask 130112
    %94 = vst.msk [vmem:[#allocation0] sm:$0x1] %vm93, %v92
    %s96 = sshllo.u32 0, 1
    %v98 = vld [vmem:[#allocation0] sm:%s96]
    %s99 = sshllo.u32 0, 1
    %100 = vst [vmem:[%s1] sm:%s99] %v98

</llo_original>
